<compile_context>
chip_gen: v7x
topology: tpu7x:2x2x1
jax: 0.10.0
libtpu: 0.0.40
codegen_flags: <defaults>
</compile_context>

<pallas_src>
import jax
import jax.numpy as jnp
import numpy as np
from jax.experimental import pallas as pl
from jax.experimental.pallas import tpu as pltpu

SIZE = 64        # mask size is hard-coded to 64 in the PyTorch module
RADIUS = 5.0     # nn.Parameter filled with 5 (static here)


def create_circle_tensor(size, radius):
    # Mirrors the torch helper (meshgrid default 'ij' indexing).
    r = jnp.arange(size, dtype=jnp.float32)
    xx, yy = jnp.meshgrid(r, r, indexing="ij")
    dist = jnp.sqrt((xx - size // 2) ** 2 + (yy - size // 2) ** 2)
    return jnp.where(dist < radius, 0.0, 1.0).astype(jnp.float32)


def _dft_matrix(n):
    # D[j, k] = exp(-2*pi*i*j*k / n)  ->  (real, imag) parts, f32. D is symmetric.
    k = jnp.arange(n, dtype=jnp.float32)
    ang = -2.0 * jnp.pi * jnp.outer(k, k) / n
    return jnp.cos(ang), jnp.sin(ang)


def _parser_kernel(x_ref, w1_ref, w2_ref, w3_ref, w4_ref, m_ref, o_ref):
    """One block of `bt` planes per grid step.

    x_ref : (bt, 64, 64) f32
    w1    : (64, 128)  bf16  = [Dr | Di]              (forward W-DFT, real input)
    w2    : (128, 128) bf16  = [[Dr, Di], [-Di, Dr]]  (forward H-DFT, complex)
    w3    : (128, 128) bf16  = [[Dr,-Di], [ Di, Dr]]  (inverse H-DFT, complex conj)
    w4    : (128, 64)  bf16  = [Dr ; Di]              (inverse W-DFT, real part only)
    m_ref : (64, 128)  f32   = [M^T | M^T], M = ifftshift(circle mask) / (H*W)

    Data layout convention: complex values live as [real | imag] along the 128 lanes;
    the plane batch is folded into the matmul M dimension (bt*64 rows).
    """
    bt, h, w = x_ref.shape
    f32, bf16 = jnp.float32, jnp.bfloat16

    w1 = w1_ref[...]
    w2 = w2_ref[...]
    w3 = w3_ref[...]
    w4 = w4_ref[...]
    m2 = m_ref[...]

    x2 = x_ref[...].reshape(bt * h, w).astype(bf16)

    # ---- forward W-DFT:  A = X @ [Dr | Di]   (M=bt*64, K=64, N=128) ----
    a = jnp.dot(x2, w1, preferred_element_type=f32).reshape(bt, h, 2 * w)

    # complex transpose per plane: (h, [q_r|q_i]) -> (q, [h_r|h_i])   (XLU)
    at = jnp.concatenate(
        [jnp.swapaxes(a[..., :w], 1, 2), jnp.swapaxes(a[..., w:], 1, 2)], axis=-1
    ).reshape(bt * w, 2 * h).astype(bf16)

    # ---- forward H-DFT (complex, fused block weight):  F^T = A^T @ W2 ----
    ftq = jnp.dot(at, w2, preferred_element_type=f32).reshape(bt, w, 2 * h)

    # ---- frequency-domain mask (shift pair + 1/(H*W) folded in), one f32 broadcast ----
    gtq = (ftq * m2).astype(bf16).reshape(bt * w, 2 * h)

    # ---- inverse H-DFT (complex conj, fused block weight):  B^T = G^T @ W3 ----
    btq = jnp.dot(gtq, w3, preferred_element_type=f32).reshape(bt, w, 2 * h)

    # complex transpose back: (q, [h_r|h_i]) -> (h, [q_r|q_i])   (XLU)
    bhat = jnp.concatenate(
        [jnp.swapaxes(btq[..., :h], 1, 2), jnp.swapaxes(btq[..., h:], 1, 2)], axis=-1
    ).reshape(bt * h, 2 * w).astype(bf16)

    # ---- inverse W-DFT, real part only:  Y = [Br | Bi] @ [Dr ; Di]  (K=128, N=64) ----
    y = jnp.dot(bhat, w4, preferred_element_type=f32)

    o_ref[...] = jnp.abs(y).reshape(bt, h, w)


def _choose_planes_per_step(n_planes, cap=32):
    # Big blocks to amortize per-step pipeline overhead; keep >= 2 grid steps (DMA overlap)
    # and an even step count so both v7x TensorCores get equal work. VMEM use per step is a
    # few MiB for cap=32 -> safe on v5e/v6e/v7x.
    if n_planes <= 1:
        return 1
    n_steps = max(2, pl.cdiv(n_planes, cap))
    if n_steps % 2:
        n_steps += 1
    return pl.cdiv(n_planes, n_steps)


def my_parser_forward(x, spatial_size=None, *, planes_per_step=None):
    # spatial_size is accepted for API parity; the PyTorch forward ignores it.
    B, C, H, W = x.shape
    assert H == SIZE and W == SIZE, "mask is hard-coded to 64x64 (requires H=W=64)"

    n_planes = B * C
    bt = int(planes_per_step) if planes_per_step is not None else _choose_planes_per_step(n_planes)
    n_steps = pl.cdiv(n_planes, bt)
    if n_steps > 1 and n_steps % 2:
        n_steps += 1            # even step count for v7x's two TensorCores
    n_planes_pad = n_steps * bt

    xf = x.reshape(n_planes, H, W).astype(jnp.float32)
    if n_planes_pad != n_planes:
        pad = jnp.zeros((n_planes_pad - n_planes, H, W), jnp.float32)
        xf = jnp.concatenate([xf, pad], axis=0)

    # Constants: bf16 DFT block weights (MXU operands) + shifted/scaled mask (f32).
    Dr, Di = _dft_matrix(SIZE)
    bf16 = jnp.bfloat16
    W1 = jnp.concatenate([Dr, Di], axis=1).astype(bf16)      # (64, 128)
    W2 = jnp.block([[Dr, Di], [-Di, Dr]]).astype(bf16)       # (128, 128)
    W3 = jnp.block([[Dr, -Di], [Di, Dr]]).astype(bf16)       # (128, 128)
    W4 = jnp.concatenate([Dr, Di], axis=0).astype(bf16)      # (128, 64)

    mask = create_circle_tensor(SIZE, RADIUS)
    # ifftshift(fftshift(F) * mask) == F * ifftshift(mask); fold the 1/(H*W) ifft norm too.
    mask_shift = jnp.fft.ifftshift(mask, axes=(-2, -1)) * (1.0 / float(H * W))
    mask2 = jnp.concatenate([mask_shift.T, mask_shift.T], axis=1).astype(jnp.float32)  # (64,128)

    flops_per_plane = 2 * SIZE * (SIZE * 2 * SIZE + 2 * (2 * SIZE) * (2 * SIZE) + (2 * SIZE) * SIZE)
    cost = pl.CostEstimate(
        flops=int(flops_per_plane * n_planes_pad),
        transcendentals=0,
        bytes_accessed=int(2 * n_planes_pad * H * W * 4),
    )

    out = pl.pallas_call(
        _parser_kernel,
        out_shape=jax.ShapeDtypeStruct((n_planes_pad, H, W), jnp.float32),
        grid=(n_steps,),
        in_specs=[
            pl.BlockSpec((bt, H, W), lambda i: (i, 0, 0)),            # image planes
            pl.BlockSpec((SIZE, 2 * SIZE), lambda i: (0, 0)),         # W1
            pl.BlockSpec((2 * SIZE, 2 * SIZE), lambda i: (0, 0)),     # W2
            pl.BlockSpec((2 * SIZE, 2 * SIZE), lambda i: (0, 0)),     # W3
            pl.BlockSpec((2 * SIZE, SIZE), lambda i: (0, 0)),         # W4
            pl.BlockSpec((SIZE, 2 * SIZE), lambda i: (0, 0)),         # shifted+scaled mask
        ],
        out_specs=pl.BlockSpec((bt, H, W), lambda i: (i, 0, 0)),
        compiler_params=pltpu.CompilerParams(dimension_semantics=("parallel",)),
        cost_estimate=cost,
    )(xf, W1, W2, W3, W4, mask2)

    return out[:n_planes].reshape(B, C, H, W)


def _reference(x):
    # Pure-JAX reference reproducing the PyTorch forward (complex64 FFT).
    x = x.astype(jnp.float32)
    mask = create_circle_tensor(SIZE, RADIUS)
    fft = jnp.fft.fftshift(jnp.fft.fft2(x, axes=(-2, -1)), axes=(-2, -1))
    fft = fft * mask
    inv = jnp.fft.ifft2(jnp.fft.ifftshift(fft, axes=(-2, -1)), axes=(-2, -1)).real
    return jnp.abs(inv)


if __name__ == "__main__":
    key = jax.random.PRNGKey(0)
    # Spatial must be 64x64 (mask is hard-coded to 64 in the module).
    x = jax.random.normal(key, (2, 4, SIZE, SIZE), dtype=jnp.float32)

    out = jax.block_until_ready(my_parser_forward(x))
    ref = jax.block_until_ready(_reference(x))

    # bf16 MXU operands with f32 accumulation -> ~0.3% RMS error vs complex64 FFT reference.
    np.testing.assert_allclose(np.asarray(out), np.asarray(ref), rtol=2e-2, atol=2e-2)

    print("KERNEL_OK")
</pallas_src>

<mosaic_0001>
module attributes {stable_mosaic.version = 11 : i64} {
  func.func @_parser_kernel(%arg0: i32, %arg1: memref<4x64x64xf32, #tpu.memory_space<vmem>>, %arg2: memref<64x128xbf16, #tpu.memory_space<vmem>>, %arg3: memref<128x128xbf16, #tpu.memory_space<vmem>>, %arg4: memref<128x128xbf16, #tpu.memory_space<vmem>>, %arg5: memref<128x64xbf16, #tpu.memory_space<vmem>>, %arg6: memref<64x128xf32, #tpu.memory_space<vmem>>, %arg7: memref<4x64x64xf32, #tpu.memory_space<vmem>>) attributes {dimension_semantics = [#tpu.dimension_semantics<parallel>], iteration_bounds = array<i64: 2>, scalar_prefetch = 0 : i64, scratch_operands = 0 : i64, tpu.core_type = #tpu.core_type<tc>, window_params = [{transform_indices = @transform_0, window_bounds = array<i64: 4, 64, 64>}, {pipeline_mode = #tpu.pipeline_mode<synchronous>, transform_indices = @transform_1, window_bounds = array<i64: 64, 128>}, {pipeline_mode = #tpu.pipeline_mode<synchronous>, transform_indices = @transform_2, window_bounds = array<i64: 128, 128>}, {pipeline_mode = #tpu.pipeline_mode<synchronous>, transform_indices = @transform_3, window_bounds = array<i64: 128, 128>}, {pipeline_mode = #tpu.pipeline_mode<synchronous>, transform_indices = @transform_4, window_bounds = array<i64: 128, 64>}, {pipeline_mode = #tpu.pipeline_mode<synchronous>, transform_indices = @transform_5, window_bounds = array<i64: 64, 128>}, {transform_indices = @transform_6, window_bounds = array<i64: 4, 64, 64>}]} {
    %c0 = arith.constant 0 : index
    %c0_0 = arith.constant 0 : index
    %0 = vector.load %arg2[%c0, %c0_0] : memref<64x128xbf16, #tpu.memory_space<vmem>>, vector<64x128xbf16>
    %c0_1 = arith.constant 0 : index
    %c0_2 = arith.constant 0 : index
    %1 = vector.load %arg3[%c0_1, %c0_2] : memref<128x128xbf16, #tpu.memory_space<vmem>>, vector<128x128xbf16>
    %c0_3 = arith.constant 0 : index
    %c0_4 = arith.constant 0 : index
    %2 = vector.load %arg4[%c0_3, %c0_4] : memref<128x128xbf16, #tpu.memory_space<vmem>>, vector<128x128xbf16>
    %c0_5 = arith.constant 0 : index
    %c0_6 = arith.constant 0 : index
    %3 = vector.load %arg5[%c0_5, %c0_6] : memref<128x64xbf16, #tpu.memory_space<vmem>>, vector<128x64xbf16>
    %c0_7 = arith.constant 0 : index
    %c0_8 = arith.constant 0 : index
    %4 = vector.load %arg6[%c0_7, %c0_8] : memref<64x128xf32, #tpu.memory_space<vmem>>, vector<64x128xf32>
    %c0_9 = arith.constant 0 : index
    %c0_10 = arith.constant 0 : index
    %c0_11 = arith.constant 0 : index
    %5 = vector.load %arg1[%c0_9, %c0_10, %c0_11] : memref<4x64x64xf32, #tpu.memory_space<vmem>>, vector<4x64x64xf32>
    %6 = vector.shape_cast %5 : vector<4x64x64xf32> to vector<256x64xf32>
    %7 = arith.truncf %6 : vector<256x64xf32> to vector<256x64xbf16>
    %cst = arith.constant dense<0.000000e+00> : vector<256x128xf32>
    %8 = tpu.matmul %7, %0, %cst {dimension_numbers = #tpu.dot_dimension_numbers<[1], [0], [0], [1], [0, 0, 1, 1], [], []>} : vector<256x64xbf16>, vector<64x128xbf16>, vector<256x128xf32> -> vector<256x128xf32>
    %9 = vector.shape_cast %8 : vector<256x128xf32> to vector<4x64x128xf32>
    %10 = vector.extract_strided_slice %9 {offsets = [0, 0, 0], sizes = [4, 64, 64], strides = [1, 1, 1]} : vector<4x64x128xf32> to vector<4x64x64xf32>
    %11 = tpu.transpose %10, [0, 2, 1] : vector<4x64x64xf32> -> vector<4x64x64xf32>
    %12 = vector.extract_strided_slice %9 {offsets = [0, 0, 64], sizes = [4, 64, 64], strides = [1, 1, 1]} : vector<4x64x128xf32> to vector<4x64x64xf32>
    %13 = tpu.transpose %12, [0, 2, 1] : vector<4x64x64xf32> -> vector<4x64x64xf32>
    %14 = tpu.concatenate %11, %13 in 2 : vector<4x64x64xf32>, vector<4x64x64xf32> -> vector<4x64x128xf32>
    %15 = vector.shape_cast %14 : vector<4x64x128xf32> to vector<256x128xf32>
    %16 = arith.truncf %15 : vector<256x128xf32> to vector<256x128xbf16>
    %cst_12 = arith.constant dense<0.000000e+00> : vector<256x128xf32>
    %17 = tpu.matmul %16, %1, %cst_12 {dimension_numbers = #tpu.dot_dimension_numbers<[1], [0], [0], [1], [0, 0, 1, 1], [], []>} : vector<256x128xbf16>, vector<128x128xbf16>, vector<256x128xf32> -> vector<256x128xf32>
    %18 = vector.shape_cast %17 : vector<256x128xf32> to vector<4x64x128xf32>
    %19 = vector.shape_cast %4 : vector<64x128xf32> to vector<1x64x128xf32>
    %20 = vector.broadcast %19 : vector<1x64x128xf32> to vector<4x64x128xf32>
    %21 = arith.mulf %18, %20 : vector<4x64x128xf32>
    %22 = arith.truncf %21 : vector<4x64x128xf32> to vector<4x64x128xbf16>
    %23 = vector.shape_cast %22 : vector<4x64x128xbf16> to vector<256x128xbf16>
    %cst_13 = arith.constant dense<0.000000e+00> : vector<256x128xf32>
    %24 = tpu.matmul %23, %2, %cst_13 {dimension_numbers = #tpu.dot_dimension_numbers<[1], [0], [0], [1], [0, 0, 1, 1], [], []>} : vector<256x128xbf16>, vector<128x128xbf16>, vector<256x128xf32> -> vector<256x128xf32>
    %25 = vector.shape_cast %24 : vector<256x128xf32> to vector<4x64x128xf32>
    %26 = vector.extract_strided_slice %25 {offsets = [0, 0, 0], sizes = [4, 64, 64], strides = [1, 1, 1]} : vector<4x64x128xf32> to vector<4x64x64xf32>
    %27 = tpu.transpose %26, [0, 2, 1] : vector<4x64x64xf32> -> vector<4x64x64xf32>
    %28 = vector.extract_strided_slice %25 {offsets = [0, 0, 64], sizes = [4, 64, 64], strides = [1, 1, 1]} : vector<4x64x128xf32> to vector<4x64x64xf32>
    %29 = tpu.transpose %28, [0, 2, 1] : vector<4x64x64xf32> -> vector<4x64x64xf32>
    %30 = tpu.concatenate %27, %29 in 2 : vector<4x64x64xf32>, vector<4x64x64xf32> -> vector<4x64x128xf32>
    %31 = vector.shape_cast %30 : vector<4x64x128xf32> to vector<256x128xf32>
    %32 = arith.truncf %31 : vector<256x128xf32> to vector<256x128xbf16>
    %cst_14 = arith.constant dense<0.000000e+00> : vector<256x64xf32>
    %33 = tpu.matmul %32, %3, %cst_14 {dimension_numbers = #tpu.dot_dimension_numbers<[1], [0], [0], [1], [0, 0, 1, 1], [], []>} : vector<256x128xbf16>, vector<128x64xbf16>, vector<256x64xf32> -> vector<256x64xf32>
    %34 = math.absf %33 : vector<256x64xf32>
    %35 = vector.shape_cast %34 : vector<256x64xf32> to vector<4x64x64xf32>
    %c0_15 = arith.constant 0 : index
    %c0_16 = arith.constant 0 : index
    %c0_17 = arith.constant 0 : index
    %36 = vector.load %arg7[%c0_15, %c0_16, %c0_17] : memref<4x64x64xf32, #tpu.memory_space<vmem>>, vector<4x64x64xf32>
    tpu.vector_store %arg7[%c0_15, %c0_16, %c0_17], %35 {strides = array<i32>} : memref<4x64x64xf32, #tpu.memory_space<vmem>>, vector<4x64x64xf32>,
    return
  }
  func.func @transform_0(%arg0: i32) -> (i32, i32, i32) {
    %c0_i32 = arith.constant 0 : i32
    %c0_i32_0 = arith.constant 0 : i32
    %c0_i32_1 = arith.constant 0 : i32
    return %arg0, %c0_i32, %c0_i32_0 : i32, i32, i32
  }
  func.func @transform_1(%arg0: i32) -> (i32, i32) {
    %c0_i32 = arith.constant 0 : i32
    %c0_i32_0 = arith.constant 0 : i32
    %c0_i32_1 = arith.constant 0 : i32
    return %c0_i32, %c0_i32_0 : i32, i32
  }
  func.func @transform_2(%arg0: i32) -> (i32, i32) {
    %c0_i32 = arith.constant 0 : i32
    %c0_i32_0 = arith.constant 0 : i32
    %c0_i32_1 = arith.constant 0 : i32
    return %c0_i32, %c0_i32_0 : i32, i32
  }
  func.func @transform_3(%arg0: i32) -> (i32, i32) {
    %c0_i32 = arith.constant 0 : i32
    %c0_i32_0 = arith.constant 0 : i32
    %c0_i32_1 = arith.constant 0 : i32
    return %c0_i32, %c0_i32_0 : i32, i32
  }
  func.func @transform_4(%arg0: i32) -> (i32, i32) {
    %c0_i32 = arith.constant 0 : i32
    %c0_i32_0 = arith.constant 0 : i32
    %c0_i32_1 = arith.constant 0 : i32
    return %c0_i32, %c0_i32_0 : i32, i32
  }
  func.func @transform_5(%arg0: i32) -> (i32, i32) {
    %c0_i32 = arith.constant 0 : i32
    %c0_i32_0 = arith.constant 0 : i32
    %c0_i32_1 = arith.constant 0 : i32
    return %c0_i32, %c0_i32_0 : i32, i32
  }
  func.func @transform_6(%arg0: i32) -> (i32, i32, i32) {
    %c0_i32 = arith.constant 0 : i32
    %c0_i32_0 = arith.constant 0 : i32
    %c0_i32_1 = arith.constant 0 : i32
    return %arg0, %c0_i32, %c0_i32_0 : i32, i32, i32
  }
}

</mosaic_0001>

<llo_original>
// kernel: tpu_custom_call.1
$region0: #{tpu_custom_call.1}
  #allocation0 [shape = 'u32[]', space=smem, size = 0x4, offset = 0x4, fixed_abs, tag = 'smem constant byte address 0x4 - core index']
  #allocation1 [shape = 'u32[144,128]{1,0:T(1,128)}', space=vmem, size = 0x12000, scoped, tag = 'internal scratch']
  %s0 = inlined_call_operand.hbm [shape: f32[8,64,64], index: 0, kind: input, shape index: {}]
  %s1 = inlined_call_operand.vmem [shape: bf16[64,128], index: 1, kind: input, shape index: {}]
  %s2 = inlined_call_operand.vmem [shape: bf16[128,128], index: 2, kind: input, shape index: {}]
  %s3 = inlined_call_operand.hbm [shape: bf16[128,128], index: 3, kind: input, shape index: {}]
  %s4 = inlined_call_operand.vmem [shape: bf16[128,64], index: 4, kind: input, shape index: {}]
  %s5 = inlined_call_operand.hbm [shape: f32[64,128], index: 5, kind: input, shape index: {}]
  %s6 = inlined_call_operand.hbm [shape: f32[8,64,64], index: 6, kind: output, shape index: {}]
  %s7 = sld [smem:[#allocation0]]
  $region69: #{tpu_custom_call.1} parent=0
    _
  %s9 = ssub.s32 1, %s7
  %s10 = scalar_select 0, %s9, %s7
  $region1: #{tpu_custom_call.1} parent=0
    #allocation2 [shape = 'u8[262144]{0}', space=vmem, size = 0x40000, scoped, tag = 'input window, operand 0']
    #allocation3 [shape = 's32[2]{0}', space=sflag, size = 0x8, scoped, tag = 'scoped memory for tpu_custom_call.1']
    #allocation4 [shape = 's32[2]{0}', space=sflag, size = 0x8, scoped, tag = 'scoped memory for tpu_custom_call.1']
    #allocation5 [shape = 'u8[32768]{0}', space=vmem, size = 0x8000, scoped, tag = 'input window, operand 3, single buffered']
    #allocation6 [shape = 's32[1]{0}', space=sflag, size = 0x4, scoped, tag = 'scoped memory for tpu_custom_call.1']
    #allocation7 [shape = 'u8[32768]{0}', space=vmem, size = 0x8000, scoped, tag = 'input window, operand 5, single buffered']
    #allocation8 [shape = 'u8[262144]{0}', space=vmem, size = 0x40000, scoped, tag = 'output window, operand 0']
    %11 = vsyncpa [#allocation3], 0
    %s12 = scalar_lea.sflag [#allocation3], 1
    %13 = vsyncpa %s12, 0
    %14 = vsyncpa [#allocation6], 0
    %15 = vsyncpa [#allocation4], 0
    %s16 = scalar_lea.sflag [#allocation4], 1
    %17 = vsyncpa %s16, 0
    loop: start=0, step=1, limit=4
    $region2: #{tpu_custom_call.1} parent=1 // loop_pre_header
      _
    $region3: #{tpu_custom_call.1} parent=1 // loop_header
      %s19 = sphi 0, %s23
      %p20 = scmp.ge.s32.totalorder %s19, 4
      %s29 = sphi 0, %s31
      %s32 = sphi 0, %s29
      %s33 = sphi 0, %s32
      %s49 = sphi 0, %s33
      %s53 = sphi 0, %s53
      %s55 = sphi 0, %s53
      %s56 = sphi 0, %s55
      %s70 = sphi 0, %s56
      %s74 = sphi 0, %s74
      %s76 = sphi 0, %s74
      %s77 = sphi 0, %s76
      %s91 = sphi 0, %s77
      %s95 = sphi 0, %s95
      %s97 = sphi 0, %s95
      %s98 = sphi 0, %s97
      %s112 = sphi 0, %s98
      %s116 = sphi 0, %s116
      %s118 = sphi 0, %s116
      %s119 = sphi 0, %s118
      %s133 = sphi 0, %s119
      %s137 = sphi 0, %s137
      %s139 = sphi 0, %s137
      %s140 = sphi 0, %s139
      %s154 = sphi 0, %s140
      %s160 = sphi 0, %s162
      %s163 = sphi 0, %s160
      %s164 = sphi 0, %s163
      %s180 = sphi 0, %s164
    $region4: #{tpu_custom_call.1} parent=1 // loop_header_branch
      %22 = sbr.rel (%p20) target = $region8
    $region5: #{tpu_custom_call.1} parent=1 // loop_body
      %s24 = ssub.s32 %s19, 1
      %s25 = ssub.s32 %s19, 2
      %s26 = sadd.s32 %s19, 1
      %s27 = ssub.s32 %s19, %s26
      %p28 = scmp.eq.s32.totalorder %s27, 0
      %s30 = sadd.s32 %s29, 1
      %s31 = scalar_select %p28, %s29, %s30
      %p34 = pneg %p28
      %p35 = scmp.eq.s32.totalorder %s19, 1
      %p36 = por %p34, %p35
      %p37 = scmp.ne.s32.totalorder %s29, %s32
      %p38 = scmp.eq.s32.totalorder %s19, 0
      %p39 = por %p37, %p38
      %p40 = scmp.ne.s32.totalorder %s29, %s32
      %p41 = scmp.eq.s32.totalorder %s24, 1
      %p42 = por %p40, %p41
      %p43 = scmp.ne.s32.totalorder %s32, %s33
      %p44 = scmp.eq.s32.totalorder %s24, 0
      %p45 = por %p43, %p44
      %p46 = scmp.ne.s32.totalorder %s32, %s33
      %p47 = scmp.eq.s32.totalorder %s25, 1
      %p48 = por %p46, %p47
      %p50 = scmp.ne.s32.totalorder %s33, %s49
      %p51 = scmp.eq.s32.totalorder %s25, 0
      %p52 = por %p50, %p51
      %s54 = sadd.s32 %s53, 1
      %p57 = scmp.eq.s32.totalorder %s19, 1
      %p58 = scmp.ne.s32.totalorder %s53, %s55
      %p59 = scmp.eq.s32.totalorder %s19, 0
      %p60 = por %p58, %p59
      %p61 = scmp.ne.s32.totalorder %s53, %s55
      %p62 = scmp.eq.s32.totalorder %s24, 1
      %p63 = por %p61, %p62
      %p64 = scmp.ne.s32.totalorder %s55, %s56
      %p65 = scmp.eq.s32.totalorder %s24, 0
      %p66 = por %p64, %p65
      %p67 = scmp.ne.s32.totalorder %s55, %s56
      %p68 = scmp.eq.s32.totalorder %s25, 1
      %p69 = por %p67, %p68
      %p71 = scmp.ne.s32.totalorder %s56, %s70
      %p72 = scmp.eq.s32.totalorder %s25, 0
      %p73 = por %p71, %p72
      %s75 = sadd.s32 %s74, 1
      %p78 = scmp.eq.s32.totalorder %s19, 1
      %p79 = scmp.ne.s32.totalorder %s74, %s76
      %p80 = scmp.eq.s32.totalorder %s19, 0
      %p81 = por %p79, %p80
      %p82 = scmp.ne.s32.totalorder %s74, %s76
      %p83 = scmp.eq.s32.totalorder %s24, 1
      %p84 = por %p82, %p83
      %p85 = scmp.ne.s32.totalorder %s76, %s77
      %p86 = scmp.eq.s32.totalorder %s24, 0
      %p87 = por %p85, %p86
      %p88 = scmp.ne.s32.totalorder %s76, %s77
      %p89 = scmp.eq.s32.totalorder %s25, 1
      %p90 = por %p88, %p89
      %p92 = scmp.ne.s32.totalorder %s77, %s91
      %p93 = scmp.eq.s32.totalorder %s25, 0
      %p94 = por %p92, %p93
      %s96 = sadd.s32 %s95, 1
      %p99 = scmp.eq.s32.totalorder %s19, 1
      %p100 = scmp.ne.s32.totalorder %s95, %s97
      %p101 = scmp.eq.s32.totalorder %s19, 0
      %p102 = por %p100, %p101
      %p103 = scmp.ne.s32.totalorder %s95, %s97
      %p104 = scmp.eq.s32.totalorder %s24, 1
      %p105 = por %p103, %p104
      %p106 = scmp.ne.s32.totalorder %s97, %s98
      %p107 = scmp.eq.s32.totalorder %s24, 0
      %p108 = por %p106, %p107
      %p109 = scmp.ne.s32.totalorder %s97, %s98
      %p110 = scmp.eq.s32.totalorder %s25, 1
      %p111 = por %p109, %p110
      %p113 = scmp.ne.s32.totalorder %s98, %s112
      %p114 = scmp.eq.s32.totalorder %s25, 0
      %p115 = por %p113, %p114
      %s117 = sadd.s32 %s116, 1
      %p120 = scmp.eq.s32.totalorder %s19, 1
      %p121 = scmp.ne.s32.totalorder %s116, %s118
      %p122 = scmp.eq.s32.totalorder %s19, 0
      %p123 = por %p121, %p122
      %p124 = scmp.ne.s32.totalorder %s116, %s118
      %p125 = scmp.eq.s32.totalorder %s24, 1
      %p126 = por %p124, %p125
      %p127 = scmp.ne.s32.totalorder %s118, %s119
      %p128 = scmp.eq.s32.totalorder %s24, 0
      %p129 = por %p127, %p128
      %p130 = scmp.ne.s32.totalorder %s118, %s119
      %p131 = scmp.eq.s32.totalorder %s25, 1
      %p132 = por %p130, %p131
      %p134 = scmp.ne.s32.totalorder %s119, %s133
      %p135 = scmp.eq.s32.totalorder %s25, 0
      %p136 = por %p134, %p135
      %s138 = sadd.s32 %s137, 1
      %p141 = scmp.eq.s32.totalorder %s19, 1
      %p142 = scmp.ne.s32.totalorder %s137, %s139
      %p143 = scmp.eq.s32.totalorder %s19, 0
      %p144 = por %p142, %p143
      %p145 = scmp.ne.s32.totalorder %s137, %s139
      %p146 = scmp.eq.s32.totalorder %s24, 1
      %p147 = por %p145, %p146
      %p148 = scmp.ne.s32.totalorder %s139, %s140
      %p149 = scmp.eq.s32.totalorder %s24, 0
      %p150 = por %p148, %p149
      %p151 = scmp.ne.s32.totalorder %s139, %s140
      %p152 = scmp.eq.s32.totalorder %s25, 1
      %p153 = por %p151, %p152
      %p155 = scmp.ne.s32.totalorder %s140, %s154
      %p156 = scmp.eq.s32.totalorder %s25, 0
      %p157 = por %p155, %p156
      %s158 = ssub.s32 %s19, %s26
      %p159 = scmp.eq.s32.totalorder %s158, 0
      %s161 = sadd.s32 %s160, 1
      %s162 = scalar_select %p159, %s160, %s161
      %p165 = pneg %p159
      %p166 = scmp.eq.s32.totalorder %s19, 1
      %p167 = por %p165, %p166
      %p168 = scmp.ne.s32.totalorder %s160, %s163
      %p169 = scmp.eq.s32.totalorder %s19, 0
      %p170 = por %p168, %p169
      %p171 = scmp.ne.s32.totalorder %s160, %s163
      %p172 = scmp.eq.s32.totalorder %s24, 1
      %p173 = por %p171, %p172
      %p174 = scmp.ne.s32.totalorder %s163, %s164
      %p175 = scmp.eq.s32.totalorder %s24, 0
      %p176 = por %p174, %p175
      %p177 = scmp.ne.s32.totalorder %s163, %s164
      %p178 = scmp.eq.s32.totalorder %s25, 1
      %p179 = por %p177, %p178
      %p181 = scmp.ne.s32.totalorder %s164, %s180
      %p182 = scmp.eq.s32.totalorder %s25, 0
      %p183 = por %p181, %p182
      %p184 = scmp.le.s32.totalorder 1, %s19
      %p185 = scmp.lt.s32.totalorder %s19, 3
      %p186 = pnand %p184, %p185
      %p187 = pneg %p186
      // Predicated region
      $region9: #{tpu_custom_call.1} parent=5 // pred_check
        _
      $region10: #{tpu_custom_call.1} parent=5 // pred_check_branch
        %189 = sbr.rel (%p186) target = $region12
      $region11: #{tpu_custom_call.1} parent=5 // pred_region
        %s190 = ssub.s32 %s19, 1
        // Predicated region
        $region13: #{tpu_custom_call.1} parent=11 // pred_check
          %p191 = pneg %p66
        $region14: #{tpu_custom_call.1} parent=11 // pred_check_branch
          %193 = sbr.rel (%p191) target = $region16
        $region15: #{tpu_custom_call.1} parent=11 // pred_region
          _
        $region16: #{tpu_custom_call.1} parent=11 // pred_fallthru
          _
        // Predicated region
        $region17: #{tpu_custom_call.1} parent=11 // pred_check
          %p194 = pneg %p87
        $region18: #{tpu_custom_call.1} parent=11 // pred_check_branch
          %196 = sbr.rel (%p194) target = $region20
        $region19: #{tpu_custom_call.1} parent=11 // pred_region
          _
        $region20: #{tpu_custom_call.1} parent=11 // pred_fallthru
          _
        // Predicated region
        $region21: #{tpu_custom_call.1} parent=11 // pred_check
          %p197 = pneg %p108
        $region22: #{tpu_custom_call.1} parent=11 // pred_check_branch
          %199 = sbr.rel (%p197) target = $region24
        $region23: #{tpu_custom_call.1} parent=11 // pred_region
          %s201 = ssub.s32 1024, 1024
          %202 = vsyncadd [#allocation6], %s201
          %s203 = sshll.u32 [#allocation5], 4
          %s204 = int_to_ptr.vmem [resolvable:$true] %s203
          %209 = dma.hbm_to_vmem [thread:$0]  %s3, 1024, %s204, [#allocation6], 64, 64, 4
        $region24: #{tpu_custom_call.1} parent=11 // pred_fallthru
          _
        // Predicated region
        $region25: #{tpu_custom_call.1} parent=11 // pred_check
          %p210 = pneg %p129
        $region26: #{tpu_custom_call.1} parent=11 // pred_check_branch
          %212 = sbr.rel (%p210) target = $region28
        $region27: #{tpu_custom_call.1} parent=11 // pred_region
          _
        $region28: #{tpu_custom_call.1} parent=11 // pred_fallthru
          _
        // Predicated region
        $region29: #{tpu_custom_call.1} parent=11 // pred_check
          %p213 = pneg %p150
        $region30: #{tpu_custom_call.1} parent=11 // pred_check_branch
          %215 = sbr.rel (%p213) target = $region32
        $region31: #{tpu_custom_call.1} parent=11 // pred_region
          %s217 = ssub.s32 1024, 1024
          %218 = vsyncadd [#allocation6], %s217
          %s219 = sshll.u32 [#allocation7], 4
          %s220 = int_to_ptr.vmem [resolvable:$true] %s219
          %225 = dma.hbm_to_vmem [thread:$0]  %s5, 1024, %s220, [#allocation6], 128, 128, 8
        $region32: #{tpu_custom_call.1} parent=11 // pred_fallthru
          _
      $region12: #{tpu_custom_call.1} parent=5 // pred_fallthru
        _
      %p226 = scmp.lt.s32.totalorder %s19, 2
      // Predicated region
      $region33: #{tpu_custom_call.1} parent=5 // pred_check
        %p227 = pneg %p226
      $region34: #{tpu_custom_call.1} parent=5 // pred_check_branch
        %229 = sbr.rel (%p227) target = $region36
      $region35: #{tpu_custom_call.1} parent=5 // pred_region
        // Predicated region
        $region37: #{tpu_custom_call.1} parent=35 // pred_check
          %p230 = pneg %p39
        $region38: #{tpu_custom_call.1} parent=35 // pred_check_branch
          %232 = sbr.rel (%p230) target = $region40
        $region39: #{tpu_custom_call.1} parent=35 // pred_region
          %s233 = sand.u32 %s29, 1
          %s234 = scalar_lea.sflag [#allocation3], %s233
          %s235 = sand.u32 %s29, 1
          %s236 = smul.addr %s235, 256
          %s237 = scalar_lea.vmem [#allocation2], %s236
          %s238 = smul.u32 4, %s19
          %s240 = ssub.s32 4096, 4096
          %241 = vsyncadd %s234, %s240
          %s242 = smul.addr %s238, 8
          %s243 = smul.addr %s242, 128
          %s244 = scalar_lea.hbm %s0, %s243
          %s245 = sshll.u32 %s237, 4
          %s246 = int_to_ptr.vmem [resolvable:$true] %s245
          %251 = dma.hbm_to_vmem [thread:$0]  %s244, 4096, %s246, %s234, 128, 128, 8
        $region40: #{tpu_custom_call.1} parent=35 // pred_fallthru
          _
      $region36: #{tpu_custom_call.1} parent=5 // pred_fallthru
        _
      %p252 = scmp.le.s32.totalorder 1, %s19
      %p253 = scmp.lt.s32.totalorder %s19, 3
      %p254 = pnand %p252, %p253
      %p255 = pneg %p254
      // Predicated region
      $region41: #{tpu_custom_call.1} parent=5 // pred_check
        _
      $region42: #{tpu_custom_call.1} parent=5 // pred_check_branch
        %257 = sbr.rel (%p254) target = $region44
      $region43: #{tpu_custom_call.1} parent=5 // pred_region
        %s258 = ssub.s32 %s19, 1
        %s259 = sand.u32 %s32, 1
        %s260 = scalar_lea.sflag [#allocation3], %s259
        %s261 = sand.u32 %s32, 1
        %s262 = smul.addr %s261, 256
        %s263 = scalar_lea.vmem [#allocation2], %s262
        // Predicated region
        $region45: #{tpu_custom_call.1} parent=43 // pred_check
          %p264 = pneg %p45
        $region46: #{tpu_custom_call.1} parent=43 // pred_check_branch
          %266 = sbr.rel (%p264) target = $region48
        $region47: #{tpu_custom_call.1} parent=43 // pred_region
          %267 = dma.done %s260, 4096
        $region48: #{tpu_custom_call.1} parent=43 // pred_fallthru
          _
        // Predicated region
        $region49: #{tpu_custom_call.1} parent=43 // pred_check
          %p268 = pneg %p108
        $region50: #{tpu_custom_call.1} parent=43 // pred_check_branch
          %270 = sbr.rel (%p268) target = $region52
        $region51: #{tpu_custom_call.1} parent=43 // pred_region
          %271 = dma.done [#allocation6], 1024
        $region52: #{tpu_custom_call.1} parent=43 // pred_fallthru
          _
        // Predicated region
        $region53: #{tpu_custom_call.1} parent=43 // pred_check
          %p272 = pneg %p150
        $region54: #{tpu_custom_call.1} parent=43 // pred_check_branch
          %274 = sbr.rel (%p272) target = $region56
        $region55: #{tpu_custom_call.1} parent=43 // pred_region
          %275 = dma.done [#allocation6], 1024
        $region56: #{tpu_custom_call.1} parent=43 // pred_fallthru
          _
        %s276 = sand.u32 %s32, 1
        %s277 = scalar_lea.sflag [#allocation3], %s276
        %s278 = sand.u32 %s32, 1
        %s279 = smul.addr %s278, 256
        %s280 = scalar_lea.vmem [#allocation2], %s279
        %p281 = pneg %p45
        %p282 = pneg %p42
        %p283 = pneg %p66
        %p284 = pneg %p63
        %p285 = pneg %p87
        %p286 = pneg %p84
        %p287 = pneg %p108
        %p288 = pneg %p105
        %p289 = pneg %p129
        %p290 = pneg %p126
        %p291 = pneg %p150
        %p292 = pneg %p147
        %p293 = pneg %p176
        %p294 = pneg %p173
        %s295 = sand.u32 %s163, 1
        %s296 = scalar_lea.sflag [#allocation4], %s295
        %s297 = sand.u32 %s163, 1
        %s298 = smul.addr %s297, 256
        %s299 = scalar_lea.vmem [#allocation8], %s298
        %s300 = smul.u32 4, %s24
        %s301 = smul.u32 4, %s24
        %v303 = vld [vmem:[%s1] sm:$0xf]
        %v304 = vld [vmem:[%s1 + $0x4] sm:$0xf]
        %v305 = vld [vmem:[%s1 + $0x8] sm:$0xf]
        %v306 = vld [vmem:[%s1 + $0xc] sm:$0xf]
        %v307 = vld [vmem:[%s1 + $0x10] sm:$0xf]
        %v308 = vld [vmem:[%s1 + $0x14] sm:$0xf]
        %v309 = vld [vmem:[%s1 + $0x18] sm:$0xf]
        %v310 = vld [vmem:[%s1 + $0x1c] sm:$0xf]
        %v311 = vld [vmem:[%s2] sm:$0xf]
        %v312 = vld [vmem:[%s2 + $0x4] sm:$0xf]
        %v313 = vld [vmem:[%s2 + $0x8] sm:$0xf]
        %v314 = vld [vmem:[%s2 + $0xc] sm:$0xf]
        %v315 = vld [vmem:[%s2 + $0x10] sm:$0xf]
        %v316 = vld [vmem:[%s2 + $0x14] sm:$0xf]
        %v317 = vld [vmem:[%s2 + $0x18] sm:$0xf]
        %v318 = vld [vmem:[%s2 + $0x1c] sm:$0xf]
        %v319 = vld [vmem:[%s2 + $0x20] sm:$0xf]
        %v320 = vld [vmem:[%s2 + $0x24] sm:$0xf]
        %v321 = vld [vmem:[%s2 + $0x28] sm:$0xf]
        %v322 = vld [vmem:[%s2 + $0x2c] sm:$0xf]
        %v323 = vld [vmem:[%s2 + $0x30] sm:$0xf]
        %v324 = vld [vmem:[%s2 + $0x34] sm:$0xf]
        %v325 = vld [vmem:[%s2 + $0x38] sm:$0xf]
        %v326 = vld [vmem:[%s2 + $0x3c] sm:$0xf]
        %v327 = vld [vmem:[#allocation5] sm:$0xf]
        %v328 = vld [vmem:[#allocation5 + $0x4] sm:$0xf]
        %v329 = vld [vmem:[#allocation5 + $0x8] sm:$0xf]
        %v330 = vld [vmem:[#allocation5 + $0xc] sm:$0xf]
        %v331 = vld [vmem:[#allocation5 + $0x10] sm:$0xf]
        %v332 = vld [vmem:[#allocation5 + $0x14] sm:$0xf]
        %v333 = vld [vmem:[#allocation5 + $0x18] sm:$0xf]
        %v334 = vld [vmem:[#allocation5 + $0x1c] sm:$0xf]
        %v335 = vld [vmem:[#allocation5 + $0x20] sm:$0xf]
        %v336 = vld [vmem:[#allocation5 + $0x24] sm:$0xf]
        %v337 = vld [vmem:[#allocation5 + $0x28] sm:$0xf]
        %v338 = vld [vmem:[#allocation5 + $0x2c] sm:$0xf]
        %v339 = vld [vmem:[#allocation5 + $0x30] sm:$0xf]
        %v340 = vld [vmem:[#allocation5 + $0x34] sm:$0xf]
        %v341 = vld [vmem:[#allocation5 + $0x38] sm:$0xf]
        %v342 = vld [vmem:[#allocation5 + $0x3c] sm:$0xf]
        %v343 = vld [vmem:[%s4] sm:$0xf]
        %v344 = vld [vmem:[%s4 + $0x4] sm:$0xf]
        %v345 = vld [vmem:[%s4 + $0x8] sm:$0xf]
        %v346 = vld [vmem:[%s4 + $0xc] sm:$0xf]
        %v347 = vld [vmem:[%s4 + $0x10] sm:$0xf]
        %v348 = vld [vmem:[%s4 + $0x14] sm:$0xf]
        %v349 = vld [vmem:[%s4 + $0x18] sm:$0xf]
        %v350 = vld [vmem:[%s4 + $0x1c] sm:$0xf]
        %v351 = vld [vmem:[%s4 + $0x20] sm:$0xf]
        %v352 = vld [vmem:[%s4 + $0x24] sm:$0xf]
        %v353 = vld [vmem:[%s4 + $0x28] sm:$0xf]
        %v354 = vld [vmem:[%s4 + $0x2c] sm:$0xf]
        %v355 = vld [vmem:[%s4 + $0x30] sm:$0xf]
        %v356 = vld [vmem:[%s4 + $0x34] sm:$0xf]
        %v357 = vld [vmem:[%s4 + $0x38] sm:$0xf]
        %v358 = vld [vmem:[%s4 + $0x3c] sm:$0xf]
        %v359 = vld [vmem:[#allocation7] sm:$0xff]
        %v360 = vld [vmem:[#allocation7 + $0x8] sm:$0xff]
        %v361 = vld [vmem:[#allocation7 + $0x10] sm:$0xff]
        %v362 = vld [vmem:[#allocation7 + $0x18] sm:$0xff]
        %v363 = vld [vmem:[#allocation7 + $0x20] sm:$0xff]
        %v364 = vld [vmem:[#allocation7 + $0x28] sm:$0xff]
        %v365 = vld [vmem:[#allocation7 + $0x30] sm:$0xff]
        %v366 = vld [vmem:[#allocation7 + $0x38] sm:$0xff]
        %v367 = vld [vmem:[%s263] sm:$0xff]
        %v368 = vld [vmem:[%s263 + $0x8] sm:$0xff]
        %v369 = vld [vmem:[%s263 + $0x10] sm:$0xff]
        %v370 = vld [vmem:[%s263 + $0x18] sm:$0xff]
        %v371 = vld [vmem:[%s263 + $0x20] sm:$0xff]
        %v372 = vld [vmem:[%s263 + $0x28] sm:$0xff]
        %v373 = vld [vmem:[%s263 + $0x30] sm:$0xff]
        %v374 = vld [vmem:[%s263 + $0x38] sm:$0xff]
        %v375 = vld [vmem:[%s263 + $0x40] sm:$0xff]
        %v376 = vld [vmem:[%s263 + $0x48] sm:$0xff]
        %v377 = vld [vmem:[%s263 + $0x50] sm:$0xff]
        %v378 = vld [vmem:[%s263 + $0x58] sm:$0xff]
        %v379 = vld [vmem:[%s263 + $0x60] sm:$0xff]
        %v380 = vld [vmem:[%s263 + $0x68] sm:$0xff]
        %v381 = vld [vmem:[%s263 + $0x70] sm:$0xff]
        %v382 = vld [vmem:[%s263 + $0x78] sm:$0xff]
        %v383 = vld [vmem:[%s263 + $0x80] sm:$0xff]
        %v384 = vld [vmem:[%s263 + $0x88] sm:$0xff]
        %v385 = vld [vmem:[%s263 + $0x90] sm:$0xff]
        %v386 = vld [vmem:[%s263 + $0x98] sm:$0xff]
        %v387 = vld [vmem:[%s263 + $0xa0] sm:$0xff]
        %v388 = vld [vmem:[%s263 + $0xa8] sm:$0xff]
        %v389 = vld [vmem:[%s263 + $0xb0] sm:$0xff]
        %v390 = vld [vmem:[%s263 + $0xb8] sm:$0xff]
        %v391 = vld [vmem:[%s263 + $0xc0] sm:$0xff]
        %v392 = vld [vmem:[%s263 + $0xc8] sm:$0xff]
        %v393 = vld [vmem:[%s263 + $0xd0] sm:$0xff]
        %v394 = vld [vmem:[%s263 + $0xd8] sm:$0xff]
        %v395 = vld [vmem:[%s263 + $0xe0] sm:$0xff]
        %v396 = vld [vmem:[%s263 + $0xe8] sm:$0xff]
        %v397 = vld [vmem:[%s263 + $0xf0] sm:$0xff]
        %v398 = vld [vmem:[%s263 + $0xf8] sm:$0xff]
        %v399 = vpack.c.bf16 %v368, %v367
        %v400 = vpack.c.bf16 %v370, %v369
        %v401 = vpack.c.bf16 %v372, %v371
        %v402 = vpack.c.bf16 %v374, %v373
        %v403 = vpack.c.bf16 %v376, %v375
        %v404 = vpack.c.bf16 %v378, %v377
        %v405 = vpack.c.bf16 %v380, %v379
        %v406 = vpack.c.bf16 %v382, %v381
        %v407 = vpack.c.bf16 %v384, %v383
        %v408 = vpack.c.bf16 %v386, %v385
        %v409 = vpack.c.bf16 %v388, %v387
        %v410 = vpack.c.bf16 %v390, %v389
        %v411 = vpack.c.bf16 %v392, %v391
        %v412 = vpack.c.bf16 %v394, %v393
        %v413 = vpack.c.bf16 %v396, %v395
        %v414 = vpack.c.bf16 %v398, %v397
        %v423 = vunpack.c.l.b16 %v303
        %v424 = vunpack.c.l.b16 %v304
        %v425 = vunpack.c.l.b16 %v305
        %v426 = vunpack.c.l.b16 %v306
        %v427 = vunpack.c.l.b16 %v307
        %v428 = vunpack.c.l.b16 %v308
        %v429 = vunpack.c.l.b16 %v309
        %v430 = vunpack.c.l.b16 %v310
        %v431 = vpack.c.b16 %v424, %v423
        %v432 = vpack.c.b16 %v426, %v425
        %v433 = vpack.c.b16 %v428, %v427
        %v434 = vpack.c.b16 %v430, %v429
        %vm439 = vcmask 523264
        %v441 = vsel %vm439, %v399, 0
        %v444 = vsel %vm439, %v400, 0
        %v447 = vsel %vm439, %v401, 0
        %v450 = vsel %vm439, %v402, 0
        %v453 = vsel %vm439, %v403, 0
        %v456 = vsel %vm439, %v404, 0
        %v459 = vsel %vm439, %v405, 0
        %v462 = vsel %vm439, %v406, 0
        %v465 = vsel %vm439, %v407, 0
        %v468 = vsel %vm439, %v408, 0
        %v471 = vsel %vm439, %v409, 0
        %v474 = vsel %vm439, %v410, 0
        %v477 = vsel %vm439, %v411, 0
        %v480 = vsel %vm439, %v412, 0
        %v483 = vsel %vm439, %v413, 0
        %v486 = vsel %vm439, %v414, 0
        %488 = vmatprep.subr.bf16.mxu0 0
        %489 = vmatpush1.bf16.msra.mxu0 %v431
        %490 = vmatprep.subr.bf16.mxu0 0
        %491 = vmatpush1.bf16.msra.mxu0 %v432
        %492 = vmatprep.subr.bf16.mxu0 0
        %493 = vmatpush1.bf16.msra.mxu0 %v433
        %494 = vmatprep.subr.bf16.mxu0 0
        %495 = vmatpush1.bf16.msra.mxu0 %v434
        %496 = vmatprep.subr.bf16.mxu0 0
        %497 = vmatpush1.bf16.msra.mxu0 0
        %498 = vmatprep.subr.bf16.mxu0 0
        %499 = vmatpush1.bf16.msra.mxu0 0
        %500 = vmatprep.subr.bf16.mxu0 0
        %501 = vmatpush1.bf16.msra.mxu0 0
        %502 = vmatprep.subr.bf16.mxu0 0
        %503 = vmatpush1.bf16.msra.mxu0 0
        %504 = vmatprep.subr.bf16.mxu0 0
        %505 = vmatpush1.bf16.msra.mxu0 0
        %506 = vmatprep.subr.bf16.mxu0 0
        %507 = vmatpush1.bf16.msra.mxu0 0
        %508 = vmatprep.subr.bf16.mxu0 0
        %509 = vmatpush1.bf16.msra.mxu0 0
        %510 = vmatprep.subr.bf16.mxu0 0
        %511 = vmatpush1.bf16.msra.mxu0 0
        %512 = vmatprep.subr.bf16.mxu0 0
        %513 = vmatpush1.bf16.msra.mxu0 0
        %514 = vmatprep.subr.bf16.mxu0 0
        %515 = vmatpush1.bf16.msra.mxu0 0
        %516 = vmatprep.subr.bf16.mxu0 0
        %517 = vmatpush1.bf16.msra.mxu0 0
        %518 = vmatprep.subr.bf16.mxu0 0
        %519 = vmatpush1.bf16.msra.mxu0 0
        %520 = vmatprep.mubr.bf16.mxu0 0
        %521 = vmatmul.mubr.bf16.gmra.mrb[0].mxu0 %v441
        %v522 = vpop.f32.mrb[0].mxu0
        %v523 = vadd.f32 0.0, %v522
        %v524 = vpop.f32.mrb[0].mxu0
        %v525 = vpop.f32.mrb[0].mxu0
        %v526 = vadd.f32 0.0, %v525
        %v527 = vpop.f32.mrb[0].mxu0
        %528 = vmatprep.mubr.bf16.mxu0 0
        %529 = vmatmul.mubr.bf16.gmra.mrb[0].mxu0 %v444
        %v530 = vpop.f32.mrb[0].mxu0
        %v531 = vadd.f32 0.0, %v530
        %v532 = vpop.f32.mrb[0].mxu0
        %v533 = vpop.f32.mrb[0].mxu0
        %v534 = vadd.f32 0.0, %v533
        %v535 = vpop.f32.mrb[0].mxu0
        %536 = vmatprep.mubr.bf16.mxu0 0
        %537 = vmatmul.mubr.bf16.gmra.mrb[0].mxu0 %v447
        %v538 = vpop.f32.mrb[0].mxu0
        %v539 = vadd.f32 0.0, %v538
        %v540 = vpop.f32.mrb[0].mxu0
        %v541 = vpop.f32.mrb[0].mxu0
        %v542 = vadd.f32 0.0, %v541
        %v543 = vpop.f32.mrb[0].mxu0
        %544 = vmatprep.mubr.bf16.mxu0 0
        %545 = vmatmul.mubr.bf16.gmra.mrb[0].mxu0 %v450
        %v546 = vpop.f32.mrb[0].mxu0
        %v547 = vadd.f32 0.0, %v546
        %v548 = vpop.f32.mrb[0].mxu0
        %v549 = vpop.f32.mrb[0].mxu0
        %v550 = vadd.f32 0.0, %v549
        %v551 = vpop.f32.mrb[0].mxu0
        %552 = vmatprep.mubr.bf16.mxu0 0
        %553 = vmatmul.mubr.bf16.gmra.mrb[0].mxu0 %v453
        %v554 = vpop.f32.mrb[0].mxu0
        %v555 = vadd.f32 0.0, %v554
        %v556 = vpop.f32.mrb[0].mxu0
        %v557 = vpop.f32.mrb[0].mxu0
        %v558 = vadd.f32 0.0, %v557
        %v559 = vpop.f32.mrb[0].mxu0
        %560 = vmatprep.mubr.bf16.mxu0 0
        %561 = vmatmul.mubr.bf16.gmra.mrb[0].mxu0 %v456
        %v562 = vpop.f32.mrb[0].mxu0
        %v563 = vadd.f32 0.0, %v562
        %v564 = vpop.f32.mrb[0].mxu0
        %v565 = vpop.f32.mrb[0].mxu0
        %v566 = vadd.f32 0.0, %v565
        %v567 = vpop.f32.mrb[0].mxu0
        %568 = vmatprep.mubr.bf16.mxu0 0
        %569 = vmatmul.mubr.bf16.gmra.mrb[0].mxu0 %v459
        %v570 = vpop.f32.mrb[0].mxu0
        %v571 = vadd.f32 0.0, %v570
        %v572 = vpop.f32.mrb[0].mxu0
        %v573 = vpop.f32.mrb[0].mxu0
        %v574 = vadd.f32 0.0, %v573
        %v575 = vpop.f32.mrb[0].mxu0
        %576 = vmatprep.mubr.bf16.mxu0 0
        %577 = vmatmul.mubr.bf16.gmra.mrb[0].mxu0 %v462
        %v578 = vpop.f32.mrb[0].mxu0
        %v579 = vadd.f32 0.0, %v578
        %v580 = vpop.f32.mrb[0].mxu0
        %v581 = vpop.f32.mrb[0].mxu0
        %v582 = vadd.f32 0.0, %v581
        %v583 = vpop.f32.mrb[0].mxu0
        %584 = vmatprep.mubr.bf16.mxu0 0
        %585 = vmatmul.mubr.bf16.gmra.mrb[0].mxu0 %v465
        %v586 = vpop.f32.mrb[0].mxu0
        %v587 = vadd.f32 0.0, %v586
        %v588 = vpop.f32.mrb[0].mxu0
        %v589 = vpop.f32.mrb[0].mxu0
        %v590 = vadd.f32 0.0, %v589
        %v591 = vpop.f32.mrb[0].mxu0
        %592 = vmatprep.mubr.bf16.mxu0 0
        %593 = vmatmul.mubr.bf16.gmra.mrb[0].mxu0 %v468
        %v594 = vpop.f32.mrb[0].mxu0
        %v595 = vadd.f32 0.0, %v594
        %v596 = vpop.f32.mrb[0].mxu0
        %v597 = vpop.f32.mrb[0].mxu0
        %v598 = vadd.f32 0.0, %v597
        %v599 = vpop.f32.mrb[0].mxu0
        %600 = vmatprep.mubr.bf16.mxu0 0
        %601 = vmatmul.mubr.bf16.gmra.mrb[0].mxu0 %v471
        %v602 = vpop.f32.mrb[0].mxu0
        %v603 = vadd.f32 0.0, %v602
        %v604 = vpop.f32.mrb[0].mxu0
        %v605 = vpop.f32.mrb[0].mxu0
        %v606 = vadd.f32 0.0, %v605
        %v607 = vpop.f32.mrb[0].mxu0
        %608 = vmatprep.mubr.bf16.mxu0 0
        %609 = vmatmul.mubr.bf16.gmra.mrb[0].mxu0 %v474
        %v610 = vpop.f32.mrb[0].mxu0
        %v611 = vadd.f32 0.0, %v610
        %v612 = vpop.f32.mrb[0].mxu0
        %v613 = vpop.f32.mrb[0].mxu0
        %v614 = vadd.f32 0.0, %v613
        %v615 = vpop.f32.mrb[0].mxu0
        %616 = vmatprep.mubr.bf16.mxu0 0
        %617 = vmatmul.mubr.bf16.gmra.mrb[0].mxu0 %v477
        %v618 = vpop.f32.mrb[0].mxu0
        %v619 = vadd.f32 0.0, %v618
        %v620 = vpop.f32.mrb[0].mxu0
        %v621 = vpop.f32.mrb[0].mxu0
        %v622 = vadd.f32 0.0, %v621
        %v623 = vpop.f32.mrb[0].mxu0
        %624 = vmatprep.mubr.bf16.mxu0 0
        %625 = vmatmul.mubr.bf16.gmra.mrb[0].mxu0 %v480
        %v626 = vpop.f32.mrb[0].mxu0
        %v627 = vadd.f32 0.0, %v626
        %v628 = vpop.f32.mrb[0].mxu0
        %v629 = vpop.f32.mrb[0].mxu0
        %v630 = vadd.f32 0.0, %v629
        %v631 = vpop.f32.mrb[0].mxu0
        %632 = vmatprep.mubr.bf16.mxu0 0
        %633 = vmatmul.mubr.bf16.gmra.mrb[0].mxu0 %v483
        %v634 = vpop.f32.mrb[0].mxu0
        %v635 = vadd.f32 0.0, %v634
        %v636 = vpop.f32.mrb[0].mxu0
        %v637 = vpop.f32.mrb[0].mxu0
        %v638 = vadd.f32 0.0, %v637
        %v639 = vpop.f32.mrb[0].mxu0
        %640 = vmatprep.mubr.bf16.mxu0 0
        %641 = vmatmul.mubr.bf16.gmra.mrb[0].mxu0 %v486
        %v642 = vpop.f32.mrb[0].mxu0
        %v643 = vadd.f32 0.0, %v642
        %v644 = vpop.f32.mrb[0].mxu0
        %v645 = vpop.f32.mrb[0].mxu0
        %v646 = vadd.f32 0.0, %v645
        %v647 = vpop.f32.mrb[0].mxu0
        %648 = vdwg.mxu0
        %649 = vxpose.xlu0.b32.start [1/16] %v523, 128
        %650 = vxpose.xlu0.b32.cont [2/16] %v526, 128
        %651 = vxpose.xlu0.b32.cont [3/16] %v531, 128
        %652 = vxpose.xlu0.b32.cont [4/16] %v534, 128
        %653 = vxpose.xlu0.b32.cont [5/16] %v539, 128
        %654 = vxpose.xlu0.b32.cont [6/16] %v542, 128
        %655 = vxpose.xlu0.b32.cont [7/16] %v547, 128
        %656 = vxpose.xlu0.b32.cont [8/16] %v550, 128
        %657 = vxpose.xlu0.b32.cont [9/16] 0.0, 128
        %658 = vxpose.xlu0.b32.cont [10/16] 0.0, 128
        %659 = vxpose.xlu0.b32.cont [11/16] 0.0, 128
        %660 = vxpose.xlu0.b32.cont [12/16] 0.0, 128
        %661 = vxpose.xlu0.b32.cont [13/16] 0.0, 128
        %662 = vxpose.xlu0.b32.cont [14/16] 0.0, 128
        %663 = vxpose.xlu0.b32.cont [15/16] 0.0, 128
        %664 = vxpose.xlu0.b32.end [16/16] 0.0, 128
        %v665 = vpop.trf.xlu0
        %v666 = vpop.trf.xlu0
        %v667 = vpop.trf.xlu0
        %v668 = vpop.trf.xlu0
        %v669 = vpop.trf.xlu0
        %v670 = vpop.trf.xlu0
        %v671 = vpop.trf.xlu0
        %v672 = vpop.trf.xlu0
        %v673 = vpop.trf.xlu0
        %v674 = vpop.trf.xlu0
        %v675 = vpop.trf.xlu0
        %v676 = vpop.trf.xlu0
        %v677 = vpop.trf.xlu0
        %v678 = vpop.trf.xlu0
        %v679 = vpop.trf.xlu0
        %v680 = vpop.trf.xlu0
        %681 = vxpose.xlu0.b32.start [1/16] %v555, 128
        %682 = vxpose.xlu0.b32.cont [2/16] %v558, 128
        %683 = vxpose.xlu0.b32.cont [3/16] %v563, 128
        %684 = vxpose.xlu0.b32.cont [4/16] %v566, 128
        %685 = vxpose.xlu0.b32.cont [5/16] %v571, 128
        %686 = vxpose.xlu0.b32.cont [6/16] %v574, 128
        %687 = vxpose.xlu0.b32.cont [7/16] %v579, 128
        %688 = vxpose.xlu0.b32.cont [8/16] %v582, 128
        %689 = vxpose.xlu0.b32.cont [9/16] 0.0, 128
        %690 = vxpose.xlu0.b32.cont [10/16] 0.0, 128
        %691 = vxpose.xlu0.b32.cont [11/16] 0.0, 128
        %692 = vxpose.xlu0.b32.cont [12/16] 0.0, 128
        %693 = vxpose.xlu0.b32.cont [13/16] 0.0, 128
        %694 = vxpose.xlu0.b32.cont [14/16] 0.0, 128
        %695 = vxpose.xlu0.b32.cont [15/16] 0.0, 128
        %696 = vxpose.xlu0.b32.end [16/16] 0.0, 128
        %v697 = vpop.trf.xlu0
        %v698 = vpop.trf.xlu0
        %v699 = vpop.trf.xlu0
        %v700 = vpop.trf.xlu0
        %v701 = vpop.trf.xlu0
        %v702 = vpop.trf.xlu0
        %v703 = vpop.trf.xlu0
        %v704 = vpop.trf.xlu0
        %v705 = vpop.trf.xlu0
        %v706 = vpop.trf.xlu0
        %v707 = vpop.trf.xlu0
        %v708 = vpop.trf.xlu0
        %v709 = vpop.trf.xlu0
        %v710 = vpop.trf.xlu0
        %v711 = vpop.trf.xlu0
        %v712 = vpop.trf.xlu0
        %713 = vxpose.xlu0.b32.start [1/16] %v587, 128
        %714 = vxpose.xlu0.b32.cont [2/16] %v590, 128
        %715 = vxpose.xlu0.b32.cont [3/16] %v595, 128
        %716 = vxpose.xlu0.b32.cont [4/16] %v598, 128
        %717 = vxpose.xlu0.b32.cont [5/16] %v603, 128
        %718 = vxpose.xlu0.b32.cont [6/16] %v606, 128
        %719 = vxpose.xlu0.b32.cont [7/16] %v611, 128
        %720 = vxpose.xlu0.b32.cont [8/16] %v614, 128
        %721 = vxpose.xlu0.b32.cont [9/16] 0.0, 128
        %722 = vxpose.xlu0.b32.cont [10/16] 0.0, 128
        %723 = vxpose.xlu0.b32.cont [11/16] 0.0, 128
        %724 = vxpose.xlu0.b32.cont [12/16] 0.0, 128
        %725 = vxpose.xlu0.b32.cont [13/16] 0.0, 128
        %726 = vxpose.xlu0.b32.cont [14/16] 0.0, 128
        %727 = vxpose.xlu0.b32.cont [15/16] 0.0, 128
        %728 = vxpose.xlu0.b32.end [16/16] 0.0, 128
        %v729 = vpop.trf.xlu0
        %v730 = vpop.trf.xlu0
        %v731 = vpop.trf.xlu0
        %v732 = vpop.trf.xlu0
        %v733 = vpop.trf.xlu0
        %v734 = vpop.trf.xlu0
        %v735 = vpop.trf.xlu0
        %v736 = vpop.trf.xlu0
        %v737 = vpop.trf.xlu0
        %v738 = vpop.trf.xlu0
        %v739 = vpop.trf.xlu0
        %v740 = vpop.trf.xlu0
        %v741 = vpop.trf.xlu0
        %v742 = vpop.trf.xlu0
        %v743 = vpop.trf.xlu0
        %v744 = vpop.trf.xlu0
        %745 = vxpose.xlu0.b32.start [1/16] %v619, 128
        %746 = vxpose.xlu0.b32.cont [2/16] %v622, 128
        %747 = vxpose.xlu0.b32.cont [3/16] %v627, 128
        %748 = vxpose.xlu0.b32.cont [4/16] %v630, 128
        %749 = vxpose.xlu0.b32.cont [5/16] %v635, 128
        %750 = vxpose.xlu0.b32.cont [6/16] %v638, 128
        %751 = vxpose.xlu0.b32.cont [7/16] %v643, 128
        %752 = vxpose.xlu0.b32.cont [8/16] %v646, 128
        %753 = vxpose.xlu0.b32.cont [9/16] 0.0, 128
        %754 = vxpose.xlu0.b32.cont [10/16] 0.0, 128
        %755 = vxpose.xlu0.b32.cont [11/16] 0.0, 128
        %756 = vxpose.xlu0.b32.cont [12/16] 0.0, 128
        %757 = vxpose.xlu0.b32.cont [13/16] 0.0, 128
        %758 = vxpose.xlu0.b32.cont [14/16] 0.0, 128
        %759 = vxpose.xlu0.b32.cont [15/16] 0.0, 128
        %760 = vxpose.xlu0.b32.end [16/16] 0.0, 128
        %v761 = vpop.trf.xlu0
        %v762 = vpop.trf.xlu0
        %v763 = vpop.trf.xlu0
        %v764 = vpop.trf.xlu0
        %v765 = vpop.trf.xlu0
        %v766 = vpop.trf.xlu0
        %v767 = vpop.trf.xlu0
        %v768 = vpop.trf.xlu0
        %v769 = vpop.trf.xlu0
        %v770 = vpop.trf.xlu0
        %v771 = vpop.trf.xlu0
        %v772 = vpop.trf.xlu0
        %v773 = vpop.trf.xlu0
        %v774 = vpop.trf.xlu0
        %v775 = vpop.trf.xlu0
        %v776 = vpop.trf.xlu0
        %809 = vrot.lane.b32.xlu0 %v523, 64
        %v810 = vpop.permute.xlu0 %809
        %811 = vrot.lane.b32.xlu0 %v526, 64
        %v812 = vpop.permute.xlu0 %811
        %813 = vrot.lane.b32.xlu0 %v531, 64
        %v814 = vpop.permute.xlu0 %813
        %815 = vrot.lane.b32.xlu0 %v534, 64
        %v816 = vpop.permute.xlu0 %815
        %817 = vrot.lane.b32.xlu0 %v539, 64
        %v818 = vpop.permute.xlu0 %817
        %819 = vrot.lane.b32.xlu0 %v542, 64
        %v820 = vpop.permute.xlu0 %819
        %821 = vrot.lane.b32.xlu0 %v547, 64
        %v822 = vpop.permute.xlu0 %821
        %823 = vrot.lane.b32.xlu0 %v550, 64
        %v824 = vpop.permute.xlu0 %823
        %825 = vrot.lane.b32.xlu0 %v555, 64
        %v826 = vpop.permute.xlu0 %825
        %827 = vrot.lane.b32.xlu0 %v558, 64
        %v828 = vpop.permute.xlu0 %827
        %829 = vrot.lane.b32.xlu0 %v563, 64
        %v830 = vpop.permute.xlu0 %829
        %831 = vrot.lane.b32.xlu0 %v566, 64
        %v832 = vpop.permute.xlu0 %831
        %833 = vrot.lane.b32.xlu0 %v571, 64
        %v834 = vpop.permute.xlu0 %833
        %835 = vrot.lane.b32.xlu0 %v574, 64
        %v836 = vpop.permute.xlu0 %835
        %837 = vrot.lane.b32.xlu0 %v579, 64
        %v838 = vpop.permute.xlu0 %837
        %839 = vrot.lane.b32.xlu0 %v582, 64
        %v840 = vpop.permute.xlu0 %839
        %841 = vrot.lane.b32.xlu0 %v587, 64
        %v842 = vpop.permute.xlu0 %841
        %843 = vrot.lane.b32.xlu0 %v590, 64
        %v844 = vpop.permute.xlu0 %843
        %845 = vrot.lane.b32.xlu0 %v595, 64
        %v846 = vpop.permute.xlu0 %845
        %847 = vrot.lane.b32.xlu0 %v598, 64
        %v848 = vpop.permute.xlu0 %847
        %849 = vrot.lane.b32.xlu0 %v603, 64
        %v850 = vpop.permute.xlu0 %849
        %851 = vrot.lane.b32.xlu0 %v606, 64
        %v852 = vpop.permute.xlu0 %851
        %853 = vrot.lane.b32.xlu0 %v611, 64
        %v854 = vpop.permute.xlu0 %853
        %855 = vrot.lane.b32.xlu0 %v614, 64
        %v856 = vpop.permute.xlu0 %855
        %857 = vrot.lane.b32.xlu0 %v619, 64
        %v858 = vpop.permute.xlu0 %857
        %859 = vrot.lane.b32.xlu0 %v622, 64
        %v860 = vpop.permute.xlu0 %859
        %861 = vrot.lane.b32.xlu0 %v627, 64
        %v862 = vpop.permute.xlu0 %861
        %863 = vrot.lane.b32.xlu0 %v630, 64
        %v864 = vpop.permute.xlu0 %863
        %865 = vrot.lane.b32.xlu0 %v635, 64
        %v866 = vpop.permute.xlu0 %865
        %867 = vrot.lane.b32.xlu0 %v638, 64
        %v868 = vpop.permute.xlu0 %867
        %869 = vrot.lane.b32.xlu0 %v643, 64
        %v870 = vpop.permute.xlu0 %869
        %871 = vrot.lane.b32.xlu0 %v646, 64
        %v872 = vpop.permute.xlu0 %871
        %905 = vxpose.xlu0.b32.start [1/16] %v810, 128
        %906 = vxpose.xlu0.b32.cont [2/16] %v812, 128
        %907 = vxpose.xlu0.b32.cont [3/16] %v814, 128
        %908 = vxpose.xlu0.b32.cont [4/16] %v816, 128
        %909 = vxpose.xlu0.b32.cont [5/16] %v818, 128
        %910 = vxpose.xlu0.b32.cont [6/16] %v820, 128
        %911 = vxpose.xlu0.b32.cont [7/16] %v822, 128
        %912 = vxpose.xlu0.b32.cont [8/16] %v824, 128
        %913 = vxpose.xlu0.b32.cont [9/16] 0.0, 128
        %914 = vxpose.xlu0.b32.cont [10/16] 0.0, 128
        %915 = vxpose.xlu0.b32.cont [11/16] 0.0, 128
        %916 = vxpose.xlu0.b32.cont [12/16] 0.0, 128
        %917 = vxpose.xlu0.b32.cont [13/16] 0.0, 128
        %918 = vxpose.xlu0.b32.cont [14/16] 0.0, 128
        %919 = vxpose.xlu0.b32.cont [15/16] 0.0, 128
        %920 = vxpose.xlu0.b32.end [16/16] 0.0, 128
        %v921 = vpop.trf.xlu0
        %v922 = vpop.trf.xlu0
        %v923 = vpop.trf.xlu0
        %v924 = vpop.trf.xlu0
        %v925 = vpop.trf.xlu0
        %v926 = vpop.trf.xlu0
        %v927 = vpop.trf.xlu0
        %v928 = vpop.trf.xlu0
        %v929 = vpop.trf.xlu0
        %v930 = vpop.trf.xlu0
        %v931 = vpop.trf.xlu0
        %v932 = vpop.trf.xlu0
        %v933 = vpop.trf.xlu0
        %v934 = vpop.trf.xlu0
        %v935 = vpop.trf.xlu0
        %v936 = vpop.trf.xlu0
        %937 = vxpose.xlu0.b32.start [1/16] %v826, 128
        %938 = vxpose.xlu0.b32.cont [2/16] %v828, 128
        %939 = vxpose.xlu0.b32.cont [3/16] %v830, 128
        %940 = vxpose.xlu0.b32.cont [4/16] %v832, 128
        %941 = vxpose.xlu0.b32.cont [5/16] %v834, 128
        %942 = vxpose.xlu0.b32.cont [6/16] %v836, 128
        %943 = vxpose.xlu0.b32.cont [7/16] %v838, 128
        %944 = vxpose.xlu0.b32.cont [8/16] %v840, 128
        %945 = vxpose.xlu0.b32.cont [9/16] 0.0, 128
        %946 = vxpose.xlu0.b32.cont [10/16] 0.0, 128
        %947 = vxpose.xlu0.b32.cont [11/16] 0.0, 128
        %948 = vxpose.xlu0.b32.cont [12/16] 0.0, 128
        %949 = vxpose.xlu0.b32.cont [13/16] 0.0, 128
        %950 = vxpose.xlu0.b32.cont [14/16] 0.0, 128
        %951 = vxpose.xlu0.b32.cont [15/16] 0.0, 128
        %952 = vxpose.xlu0.b32.end [16/16] 0.0, 128
        %v953 = vpop.trf.xlu0
        %v954 = vpop.trf.xlu0
        %v955 = vpop.trf.xlu0
        %v956 = vpop.trf.xlu0
        %v957 = vpop.trf.xlu0
        %v958 = vpop.trf.xlu0
        %v959 = vpop.trf.xlu0
        %v960 = vpop.trf.xlu0
        %v961 = vpop.trf.xlu0
        %v962 = vpop.trf.xlu0
        %v963 = vpop.trf.xlu0
        %v964 = vpop.trf.xlu0
        %v965 = vpop.trf.xlu0
        %v966 = vpop.trf.xlu0
        %v967 = vpop.trf.xlu0
        %v968 = vpop.trf.xlu0
        %969 = vxpose.xlu0.b32.start [1/16] %v842, 128
        %970 = vxpose.xlu0.b32.cont [2/16] %v844, 128
        %971 = vxpose.xlu0.b32.cont [3/16] %v846, 128
        %972 = vxpose.xlu0.b32.cont [4/16] %v848, 128
        %973 = vxpose.xlu0.b32.cont [5/16] %v850, 128
        %974 = vxpose.xlu0.b32.cont [6/16] %v852, 128
        %975 = vxpose.xlu0.b32.cont [7/16] %v854, 128
        %976 = vxpose.xlu0.b32.cont [8/16] %v856, 128
        %977 = vxpose.xlu0.b32.cont [9/16] 0.0, 128
        %978 = vxpose.xlu0.b32.cont [10/16] 0.0, 128
        %979 = vxpose.xlu0.b32.cont [11/16] 0.0, 128
        %980 = vxpose.xlu0.b32.cont [12/16] 0.0, 128
        %981 = vxpose.xlu0.b32.cont [13/16] 0.0, 128
        %982 = vxpose.xlu0.b32.cont [14/16] 0.0, 128
        %983 = vxpose.xlu0.b32.cont [15/16] 0.0, 128
        %984 = vxpose.xlu0.b32.end [16/16] 0.0, 128
        %v985 = vpop.trf.xlu0
        %v986 = vpop.trf.xlu0
        %v987 = vpop.trf.xlu0
        %v988 = vpop.trf.xlu0
        %v989 = vpop.trf.xlu0
        %v990 = vpop.trf.xlu0
        %v991 = vpop.trf.xlu0
        %v992 = vpop.trf.xlu0
        %v993 = vpop.trf.xlu0
        %v994 = vpop.trf.xlu0
        %v995 = vpop.trf.xlu0
        %v996 = vpop.trf.xlu0
        %v997 = vpop.trf.xlu0
        %v998 = vpop.trf.xlu0
        %v999 = vpop.trf.xlu0
        %v1000 = vpop.trf.xlu0
        %1001 = vxpose.xlu0.b32.start [1/16] %v858, 128
        %1002 = vxpose.xlu0.b32.cont [2/16] %v860, 128
        %1003 = vxpose.xlu0.b32.cont [3/16] %v862, 128
        %1004 = vxpose.xlu0.b32.cont [4/16] %v864, 128
        %1005 = vxpose.xlu0.b32.cont [5/16] %v866, 128
        %1006 = vxpose.xlu0.b32.cont [6/16] %v868, 128
        %1007 = vxpose.xlu0.b32.cont [7/16] %v870, 128
        %1008 = vxpose.xlu0.b32.cont [8/16] %v872, 128
        %1009 = vxpose.xlu0.b32.cont [9/16] 0.0, 128
        %1010 = vxpose.xlu0.b32.cont [10/16] 0.0, 128
        %1011 = vxpose.xlu0.b32.cont [11/16] 0.0, 128
        %1012 = vxpose.xlu0.b32.cont [12/16] 0.0, 128
        %1013 = vxpose.xlu0.b32.cont [13/16] 0.0, 128
        %1014 = vxpose.xlu0.b32.cont [14/16] 0.0, 128
        %1015 = vxpose.xlu0.b32.cont [15/16] 0.0, 128
        %1016 = vxpose.xlu0.b32.end [16/16] 0.0, 128
        %v1017 = vpop.trf.xlu0
        %v1018 = vpop.trf.xlu0
        %v1019 = vpop.trf.xlu0
        %v1020 = vpop.trf.xlu0
        %v1021 = vpop.trf.xlu0
        %v1022 = vpop.trf.xlu0
        %v1023 = vpop.trf.xlu0
        %v1024 = vpop.trf.xlu0
        %v1025 = vpop.trf.xlu0
        %v1026 = vpop.trf.xlu0
        %v1027 = vpop.trf.xlu0
        %v1028 = vpop.trf.xlu0
        %v1029 = vpop.trf.xlu0
        %v1030 = vpop.trf.xlu0
        %v1031 = vpop.trf.xlu0
        %v1032 = vpop.trf.xlu0
        %1065 = vrot.lane.b32.xlu0 %v921, 64
        %v1066 = vpop.permute.xlu0 %1065
        %1067 = vrot.lane.b32.xlu0 %v922, 64
        %v1068 = vpop.permute.xlu0 %1067
        %1069 = vrot.lane.b32.xlu0 %v923, 64
        %v1070 = vpop.permute.xlu0 %1069
        %1071 = vrot.lane.b32.xlu0 %v924, 64
        %v1072 = vpop.permute.xlu0 %1071
        %1073 = vrot.lane.b32.xlu0 %v925, 64
        %v1074 = vpop.permute.xlu0 %1073
        %1075 = vrot.lane.b32.xlu0 %v926, 64
        %v1076 = vpop.permute.xlu0 %1075
        %1077 = vrot.lane.b32.xlu0 %v927, 64
        %v1078 = vpop.permute.xlu0 %1077
        %1079 = vrot.lane.b32.xlu0 %v928, 64
        %v1080 = vpop.permute.xlu0 %1079
        %1081 = vrot.lane.b32.xlu0 %v953, 64
        %v1082 = vpop.permute.xlu0 %1081
        %1083 = vrot.lane.b32.xlu0 %v954, 64
        %v1084 = vpop.permute.xlu0 %1083
        %1085 = vrot.lane.b32.xlu0 %v955, 64
        %v1086 = vpop.permute.xlu0 %1085
        %1087 = vrot.lane.b32.xlu0 %v956, 64
        %v1088 = vpop.permute.xlu0 %1087
        %1089 = vrot.lane.b32.xlu0 %v957, 64
        %v1090 = vpop.permute.xlu0 %1089
        %1091 = vrot.lane.b32.xlu0 %v958, 64
        %v1092 = vpop.permute.xlu0 %1091
        %1093 = vrot.lane.b32.xlu0 %v959, 64
        %v1094 = vpop.permute.xlu0 %1093
        %1095 = vrot.lane.b32.xlu0 %v960, 64
        %v1096 = vpop.permute.xlu0 %1095
        %1097 = vrot.lane.b32.xlu0 %v985, 64
        %v1098 = vpop.permute.xlu0 %1097
        %1099 = vrot.lane.b32.xlu0 %v986, 64
        %v1100 = vpop.permute.xlu0 %1099
        %1101 = vrot.lane.b32.xlu0 %v987, 64
        %v1102 = vpop.permute.xlu0 %1101
        %1103 = vrot.lane.b32.xlu0 %v988, 64
        %v1104 = vpop.permute.xlu0 %1103
        %1105 = vrot.lane.b32.xlu0 %v989, 64
        %v1106 = vpop.permute.xlu0 %1105
        %1107 = vrot.lane.b32.xlu0 %v990, 64
        %v1108 = vpop.permute.xlu0 %1107
        %1109 = vrot.lane.b32.xlu0 %v991, 64
        %v1110 = vpop.permute.xlu0 %1109
        %1111 = vrot.lane.b32.xlu0 %v992, 64
        %v1112 = vpop.permute.xlu0 %1111
        %1113 = vrot.lane.b32.xlu0 %v1017, 64
        %v1114 = vpop.permute.xlu0 %1113
        %1115 = vrot.lane.b32.xlu0 %v1018, 64
        %v1116 = vpop.permute.xlu0 %1115
        %1117 = vrot.lane.b32.xlu0 %v1019, 64
        %v1118 = vpop.permute.xlu0 %1117
        %1119 = vrot.lane.b32.xlu0 %v1020, 64
        %v1120 = vpop.permute.xlu0 %1119
        %1121 = vrot.lane.b32.xlu0 %v1021, 64
        %v1122 = vpop.permute.xlu0 %1121
        %1123 = vrot.lane.b32.xlu0 %v1022, 64
        %v1124 = vpop.permute.xlu0 %1123
        %1125 = vrot.lane.b32.xlu0 %v1023, 64
        %v1126 = vpop.permute.xlu0 %1125
        %1127 = vrot.lane.b32.xlu0 %v1024, 64
        %v1128 = vpop.permute.xlu0 %1127
        %v1161 = vsel %vm439, %v665, %v1066
        %v1162 = vsel %vm439, %v666, %v1068
        %v1163 = vsel %vm439, %v667, %v1070
        %v1164 = vsel %vm439, %v668, %v1072
        %v1165 = vsel %vm439, %v669, %v1074
        %v1166 = vsel %vm439, %v670, %v1076
        %v1167 = vsel %vm439, %v671, %v1078
        %v1168 = vsel %vm439, %v672, %v1080
        %v1169 = vsel %vm439, %v697, %v1082
        %v1170 = vsel %vm439, %v698, %v1084
        %v1171 = vsel %vm439, %v699, %v1086
        %v1172 = vsel %vm439, %v700, %v1088
        %v1173 = vsel %vm439, %v701, %v1090
        %v1174 = vsel %vm439, %v702, %v1092
        %v1175 = vsel %vm439, %v703, %v1094
        %v1176 = vsel %vm439, %v704, %v1096
        %v1177 = vsel %vm439, %v729, %v1098
        %v1178 = vsel %vm439, %v730, %v1100
        %v1179 = vsel %vm439, %v731, %v1102
        %v1180 = vsel %vm439, %v732, %v1104
        %v1181 = vsel %vm439, %v733, %v1106
        %v1182 = vsel %vm439, %v734, %v1108
        %v1183 = vsel %vm439, %v735, %v1110
        %v1184 = vsel %vm439, %v736, %v1112
        %v1185 = vsel %vm439, %v761, %v1114
        %v1186 = vsel %vm439, %v762, %v1116
        %v1187 = vsel %vm439, %v763, %v1118
        %v1188 = vsel %vm439, %v764, %v1120
        %v1189 = vsel %vm439, %v765, %v1122
        %v1190 = vsel %vm439, %v766, %v1124
        %v1191 = vsel %vm439, %v767, %v1126
        %v1192 = vsel %vm439, %v768, %v1128
        %v1193 = vpack.c.bf16 %v1162, %v1161
        %v1194 = vpack.c.bf16 %v1164, %v1163
        %v1195 = vpack.c.bf16 %v1166, %v1165
        %v1196 = vpack.c.bf16 %v1168, %v1167
        %v1197 = vpack.c.bf16 %v1170, %v1169
        %v1198 = vpack.c.bf16 %v1172, %v1171
        %v1199 = vpack.c.bf16 %v1174, %v1173
        %v1200 = vpack.c.bf16 %v1176, %v1175
        %v1201 = vpack.c.bf16 %v1178, %v1177
        %v1202 = vpack.c.bf16 %v1180, %v1179
        %v1203 = vpack.c.bf16 %v1182, %v1181
        %v1204 = vpack.c.bf16 %v1184, %v1183
        %v1205 = vpack.c.bf16 %v1186, %v1185
        %v1206 = vpack.c.bf16 %v1188, %v1187
        %v1207 = vpack.c.bf16 %v1190, %v1189
        %v1208 = vpack.c.bf16 %v1192, %v1191
        %v1225 = vunpack.c.l.b16 %v311
        %v1226 = vunpack.c.l.b16 %v312
        %v1227 = vunpack.c.l.b16 %v313
        %v1228 = vunpack.c.l.b16 %v314
        %v1229 = vunpack.c.l.b16 %v315
        %v1230 = vunpack.c.l.b16 %v316
        %v1231 = vunpack.c.l.b16 %v317
        %v1232 = vunpack.c.l.b16 %v318
        %v1233 = vunpack.c.l.b16 %v319
        %v1234 = vunpack.c.l.b16 %v320
        %v1235 = vunpack.c.l.b16 %v321
        %v1236 = vunpack.c.l.b16 %v322
        %v1237 = vunpack.c.l.b16 %v323
        %v1238 = vunpack.c.l.b16 %v324
        %v1239 = vunpack.c.l.b16 %v325
        %v1240 = vunpack.c.l.b16 %v326
        %v1241 = vpack.c.b16 %v1226, %v1225
        %v1242 = vpack.c.b16 %v1228, %v1227
        %v1243 = vpack.c.b16 %v1230, %v1229
        %v1244 = vpack.c.b16 %v1232, %v1231
        %v1245 = vpack.c.b16 %v1234, %v1233
        %v1246 = vpack.c.b16 %v1236, %v1235
        %v1247 = vpack.c.b16 %v1238, %v1237
        %v1248 = vpack.c.b16 %v1240, %v1239
        %1257 = vmatprep.subr.bf16.mxu0 0
        %1258 = vmatpush1.bf16.msra.mxu0 %v1241
        %1259 = vmatprep.subr.bf16.mxu0 0
        %1260 = vmatpush1.bf16.msra.mxu0 %v1242
        %1261 = vmatprep.subr.bf16.mxu0 0
        %1262 = vmatpush1.bf16.msra.mxu0 %v1243
        %1263 = vmatprep.subr.bf16.mxu0 0
        %1264 = vmatpush1.bf16.msra.mxu0 %v1244
        %1265 = vmatprep.subr.bf16.mxu0 0
        %1266 = vmatpush1.bf16.msra.mxu0 %v1245
        %1267 = vmatprep.subr.bf16.mxu0 0
        %1268 = vmatpush1.bf16.msra.mxu0 %v1246
        %1269 = vmatprep.subr.bf16.mxu0 0
        %1270 = vmatpush1.bf16.msra.mxu0 %v1247
        %1271 = vmatprep.subr.bf16.mxu0 0
        %1272 = vmatpush1.bf16.msra.mxu0 %v1248
        %1273 = vmatprep.subr.bf16.mxu0 0
        %1274 = vmatpush1.bf16.msra.mxu0 0
        %1275 = vmatprep.subr.bf16.mxu0 0
        %1276 = vmatpush1.bf16.msra.mxu0 0
        %1277 = vmatprep.subr.bf16.mxu0 0
        %1278 = vmatpush1.bf16.msra.mxu0 0
        %1279 = vmatprep.subr.bf16.mxu0 0
        %1280 = vmatpush1.bf16.msra.mxu0 0
        %1281 = vmatprep.subr.bf16.mxu0 0
        %1282 = vmatpush1.bf16.msra.mxu0 0
        %1283 = vmatprep.subr.bf16.mxu0 0
        %1284 = vmatpush1.bf16.msra.mxu0 0
        %1285 = vmatprep.subr.bf16.mxu0 0
        %1286 = vmatpush1.bf16.msra.mxu0 0
        %1287 = vmatprep.subr.bf16.mxu0 0
        %1288 = vmatpush1.bf16.msra.mxu0 0
        %1289 = vmatprep.mubr.bf16.mxu0 0
        %1290 = vmatmul.mubr.bf16.gmra.mrb[0].mxu0 %v1193
        %v1291 = vpop.f32.mrb[0].mxu0
        %v1292 = vadd.f32 0.0, %v1291
        %v1293 = vpop.f32.mrb[0].mxu0
        %v1294 = vpop.f32.mrb[0].mxu0
        %v1295 = vadd.f32 0.0, %v1294
        %v1296 = vpop.f32.mrb[0].mxu0
        %1297 = vmatprep.mubr.bf16.mxu0 0
        %1298 = vmatmul.mubr.bf16.gmra.mrb[0].mxu0 %v1194
        %v1299 = vpop.f32.mrb[0].mxu0
        %v1300 = vadd.f32 0.0, %v1299
        %v1301 = vpop.f32.mrb[0].mxu0
        %v1302 = vpop.f32.mrb[0].mxu0
        %v1303 = vadd.f32 0.0, %v1302
        %v1304 = vpop.f32.mrb[0].mxu0
        %1305 = vmatprep.mubr.bf16.mxu0 0
        %1306 = vmatmul.mubr.bf16.gmra.mrb[0].mxu0 %v1195
        %v1307 = vpop.f32.mrb[0].mxu0
        %v1308 = vadd.f32 0.0, %v1307
        %v1309 = vpop.f32.mrb[0].mxu0
        %v1310 = vpop.f32.mrb[0].mxu0
        %v1311 = vadd.f32 0.0, %v1310
        %v1312 = vpop.f32.mrb[0].mxu0
        %1313 = vmatprep.mubr.bf16.mxu0 0
        %1314 = vmatmul.mubr.bf16.gmra.mrb[0].mxu0 %v1196
        %v1315 = vpop.f32.mrb[0].mxu0
        %v1316 = vadd.f32 0.0, %v1315
        %v1317 = vpop.f32.mrb[0].mxu0
        %v1318 = vpop.f32.mrb[0].mxu0
        %v1319 = vadd.f32 0.0, %v1318
        %v1320 = vpop.f32.mrb[0].mxu0
        %1321 = vmatprep.mubr.bf16.mxu0 0
        %1322 = vmatmul.mubr.bf16.gmra.mrb[0].mxu0 %v1197
        %v1323 = vpop.f32.mrb[0].mxu0
        %v1324 = vadd.f32 0.0, %v1323
        %v1325 = vpop.f32.mrb[0].mxu0
        %v1326 = vpop.f32.mrb[0].mxu0
        %v1327 = vadd.f32 0.0, %v1326
        %v1328 = vpop.f32.mrb[0].mxu0
        %1329 = vmatprep.mubr.bf16.mxu0 0
        %1330 = vmatmul.mubr.bf16.gmra.mrb[0].mxu0 %v1198
        %v1331 = vpop.f32.mrb[0].mxu0
        %v1332 = vadd.f32 0.0, %v1331
        %v1333 = vpop.f32.mrb[0].mxu0
        %v1334 = vpop.f32.mrb[0].mxu0
        %v1335 = vadd.f32 0.0, %v1334
        %v1336 = vpop.f32.mrb[0].mxu0
        %1337 = vmatprep.mubr.bf16.mxu0 0
        %1338 = vmatmul.mubr.bf16.gmra.mrb[0].mxu0 %v1199
        %v1339 = vpop.f32.mrb[0].mxu0
        %v1340 = vadd.f32 0.0, %v1339
        %v1341 = vpop.f32.mrb[0].mxu0
        %v1342 = vpop.f32.mrb[0].mxu0
        %v1343 = vadd.f32 0.0, %v1342
        %v1344 = vpop.f32.mrb[0].mxu0
        %1345 = vmatprep.mubr.bf16.mxu0 0
        %1346 = vmatmul.mubr.bf16.gmra.mrb[0].mxu0 %v1200
        %v1347 = vpop.f32.mrb[0].mxu0
        %v1348 = vadd.f32 0.0, %v1347
        %v1349 = vpop.f32.mrb[0].mxu0
        %v1350 = vpop.f32.mrb[0].mxu0
        %v1351 = vadd.f32 0.0, %v1350
        %v1352 = vpop.f32.mrb[0].mxu0
        %1353 = vmatprep.mubr.bf16.mxu0 0
        %1354 = vmatmul.mubr.bf16.gmra.mrb[0].mxu0 %v1201
        %v1355 = vpop.f32.mrb[0].mxu0
        %v1356 = vadd.f32 0.0, %v1355
        %v1357 = vpop.f32.mrb[0].mxu0
        %v1358 = vpop.f32.mrb[0].mxu0
        %v1359 = vadd.f32 0.0, %v1358
        %v1360 = vpop.f32.mrb[0].mxu0
        %1361 = vmatprep.mubr.bf16.mxu0 0
        %1362 = vmatmul.mubr.bf16.gmra.mrb[0].mxu0 %v1202
        %v1363 = vpop.f32.mrb[0].mxu0
        %v1364 = vadd.f32 0.0, %v1363
        %v1365 = vpop.f32.mrb[0].mxu0
        %v1366 = vpop.f32.mrb[0].mxu0
        %v1367 = vadd.f32 0.0, %v1366
        %v1368 = vpop.f32.mrb[0].mxu0
        %1369 = vmatprep.mubr.bf16.mxu0 0
        %1370 = vmatmul.mubr.bf16.gmra.mrb[0].mxu0 %v1203
        %v1371 = vpop.f32.mrb[0].mxu0
        %v1372 = vadd.f32 0.0, %v1371
        %v1373 = vpop.f32.mrb[0].mxu0
        %v1374 = vpop.f32.mrb[0].mxu0
        %v1375 = vadd.f32 0.0, %v1374
        %v1376 = vpop.f32.mrb[0].mxu0
        %1377 = vmatprep.mubr.bf16.mxu0 0
        %1378 = vmatmul.mubr.bf16.gmra.mrb[0].mxu0 %v1204
        %v1379 = vpop.f32.mrb[0].mxu0
        %v1380 = vadd.f32 0.0, %v1379
        %v1381 = vpop.f32.mrb[0].mxu0
        %v1382 = vpop.f32.mrb[0].mxu0
        %v1383 = vadd.f32 0.0, %v1382
        %v1384 = vpop.f32.mrb[0].mxu0
        %1385 = vmatprep.mubr.bf16.mxu0 0
        %1386 = vmatmul.mubr.bf16.gmra.mrb[0].mxu0 %v1205
        %v1387 = vpop.f32.mrb[0].mxu0
        %v1388 = vadd.f32 0.0, %v1387
        %v1389 = vpop.f32.mrb[0].mxu0
        %v1390 = vpop.f32.mrb[0].mxu0
        %v1391 = vadd.f32 0.0, %v1390
        %v1392 = vpop.f32.mrb[0].mxu0
        %1393 = vmatprep.mubr.bf16.mxu0 0
        %1394 = vmatmul.mubr.bf16.gmra.mrb[0].mxu0 %v1206
        %v1395 = vpop.f32.mrb[0].mxu0
        %v1396 = vadd.f32 0.0, %v1395
        %v1397 = vpop.f32.mrb[0].mxu0
        %v1398 = vpop.f32.mrb[0].mxu0
        %v1399 = vadd.f32 0.0, %v1398
        %v1400 = vpop.f32.mrb[0].mxu0
        %1401 = vmatprep.mubr.bf16.mxu0 0
        %1402 = vmatmul.mubr.bf16.gmra.mrb[0].mxu0 %v1207
        %v1403 = vpop.f32.mrb[0].mxu0
        %v1404 = vadd.f32 0.0, %v1403
        %v1405 = vpop.f32.mrb[0].mxu0
        %v1406 = vpop.f32.mrb[0].mxu0
        %v1407 = vadd.f32 0.0, %v1406
        %v1408 = vpop.f32.mrb[0].mxu0
        %1409 = vmatprep.mubr.bf16.mxu0 0
        %1410 = vmatmul.mubr.bf16.gmra.mrb[0].mxu0 %v1208
        %v1411 = vpop.f32.mrb[0].mxu0
        %v1412 = vadd.f32 0.0, %v1411
        %v1413 = vpop.f32.mrb[0].mxu0
        %v1414 = vpop.f32.mrb[0].mxu0
        %v1415 = vadd.f32 0.0, %v1414
        %v1416 = vpop.f32.mrb[0].mxu0
        %1417 = vdwg.mxu0
        %v1418 = vmul.f32 %v1292, %v359
        %v1419 = vmul.f32 %v1295, %v360
        %v1420 = vmul.f32 %v1300, %v361
        %v1421 = vmul.f32 %v1303, %v362
        %v1422 = vmul.f32 %v1308, %v363
        %v1423 = vmul.f32 %v1311, %v364
        %v1424 = vmul.f32 %v1316, %v365
        %v1425 = vmul.f32 %v1319, %v366
        %v1426 = vmul.f32 %v1324, %v359
        %v1427 = vmul.f32 %v1327, %v360
        %v1428 = vmul.f32 %v1332, %v361
        %v1429 = vmul.f32 %v1335, %v362
        %v1430 = vmul.f32 %v1340, %v363
        %v1431 = vmul.f32 %v1343, %v364
        %v1432 = vmul.f32 %v1348, %v365
        %v1433 = vmul.f32 %v1351, %v366
        %v1434 = vmul.f32 %v1356, %v359
        %v1435 = vmul.f32 %v1359, %v360
        %v1436 = vmul.f32 %v1364, %v361
        %v1437 = vmul.f32 %v1367, %v362
        %v1438 = vmul.f32 %v1372, %v363
        %v1439 = vmul.f32 %v1375, %v364
        %v1440 = vmul.f32 %v1380, %v365
        %v1441 = vmul.f32 %v1383, %v366
        %v1442 = vmul.f32 %v1388, %v359
        %v1443 = vmul.f32 %v1391, %v360
        %v1444 = vmul.f32 %v1396, %v361
        %v1445 = vmul.f32 %v1399, %v362
        %v1446 = vmul.f32 %v1404, %v363
        %v1447 = vmul.f32 %v1407, %v364
        %v1448 = vmul.f32 %v1412, %v365
        %v1449 = vmul.f32 %v1415, %v366
        %v1450 = vpack.c.bf16 %v1419, %v1418
        %v1451 = vpack.c.bf16 %v1421, %v1420
        %v1452 = vpack.c.bf16 %v1423, %v1422
        %v1453 = vpack.c.bf16 %v1425, %v1424
        %v1454 = vpack.c.bf16 %v1427, %v1426
        %v1455 = vpack.c.bf16 %v1429, %v1428
        %v1456 = vpack.c.bf16 %v1431, %v1430
        %v1457 = vpack.c.bf16 %v1433, %v1432
        %v1458 = vpack.c.bf16 %v1435, %v1434
        %v1459 = vpack.c.bf16 %v1437, %v1436
        %v1460 = vpack.c.bf16 %v1439, %v1438
        %v1461 = vpack.c.bf16 %v1441, %v1440
        %v1462 = vpack.c.bf16 %v1443, %v1442
        %v1463 = vpack.c.bf16 %v1445, %v1444
        %v1464 = vpack.c.bf16 %v1447, %v1446
        %v1465 = vpack.c.bf16 %v1449, %v1448
        %v1482 = vunpack.c.l.b16 %v327
        %v1483 = vunpack.c.l.b16 %v328
        %v1484 = vunpack.c.l.b16 %v329
        %v1485 = vunpack.c.l.b16 %v330
        %v1486 = vunpack.c.l.b16 %v331
        %v1487 = vunpack.c.l.b16 %v332
        %v1488 = vunpack.c.l.b16 %v333
        %v1489 = vunpack.c.l.b16 %v334
        %v1490 = vunpack.c.l.b16 %v335
        %v1491 = vunpack.c.l.b16 %v336
        %v1492 = vunpack.c.l.b16 %v337
        %v1493 = vunpack.c.l.b16 %v338
        %v1494 = vunpack.c.l.b16 %v339
        %v1495 = vunpack.c.l.b16 %v340
        %v1496 = vunpack.c.l.b16 %v341
        %v1497 = vunpack.c.l.b16 %v342
        %v1498 = vpack.c.b16 %v1483, %v1482
        %v1499 = vpack.c.b16 %v1485, %v1484
        %v1500 = vpack.c.b16 %v1487, %v1486
        %v1501 = vpack.c.b16 %v1489, %v1488
        %v1502 = vpack.c.b16 %v1491, %v1490
        %v1503 = vpack.c.b16 %v1493, %v1492
        %v1504 = vpack.c.b16 %v1495, %v1494
        %v1505 = vpack.c.b16 %v1497, %v1496
        %1514 = vmatprep.subr.bf16.mxu0 0
        %1515 = vmatpush1.bf16.msra.mxu0 %v1498
        %1516 = vmatprep.subr.bf16.mxu0 0
        %1517 = vmatpush1.bf16.msra.mxu0 %v1499
        %1518 = vmatprep.subr.bf16.mxu0 0
        %1519 = vmatpush1.bf16.msra.mxu0 %v1500
        %1520 = vmatprep.subr.bf16.mxu0 0
        %1521 = vmatpush1.bf16.msra.mxu0 %v1501
        %1522 = vmatprep.subr.bf16.mxu0 0
        %1523 = vmatpush1.bf16.msra.mxu0 %v1502
        %1524 = vmatprep.subr.bf16.mxu0 0
        %1525 = vmatpush1.bf16.msra.mxu0 %v1503
        %1526 = vmatprep.subr.bf16.mxu0 0
        %1527 = vmatpush1.bf16.msra.mxu0 %v1504
        %1528 = vmatprep.subr.bf16.mxu0 0
        %1529 = vmatpush1.bf16.msra.mxu0 %v1505
        %1530 = vmatprep.subr.bf16.mxu0 0
        %1531 = vmatpush1.bf16.msra.mxu0 0
        %1532 = vmatprep.subr.bf16.mxu0 0
        %1533 = vmatpush1.bf16.msra.mxu0 0
        %1534 = vmatprep.subr.bf16.mxu0 0
        %1535 = vmatpush1.bf16.msra.mxu0 0
        %1536 = vmatprep.subr.bf16.mxu0 0
        %1537 = vmatpush1.bf16.msra.mxu0 0
        %1538 = vmatprep.subr.bf16.mxu0 0
        %1539 = vmatpush1.bf16.msra.mxu0 0
        %1540 = vmatprep.subr.bf16.mxu0 0
        %1541 = vmatpush1.bf16.msra.mxu0 0
        %1542 = vmatprep.subr.bf16.mxu0 0
        %1543 = vmatpush1.bf16.msra.mxu0 0
        %1544 = vmatprep.subr.bf16.mxu0 0
        %1545 = vmatpush1.bf16.msra.mxu0 0
        %1546 = vmatprep.mubr.bf16.mxu0 0
        %1547 = vmatmul.mubr.bf16.gmra.mrb[0].mxu0 %v1450
        %v1548 = vpop.f32.mrb[0].mxu0
        %v1549 = vadd.f32 0.0, %v1548
        %v1550 = vpop.f32.mrb[0].mxu0
        %v1551 = vpop.f32.mrb[0].mxu0
        %v1552 = vadd.f32 0.0, %v1551
        %v1553 = vpop.f32.mrb[0].mxu0
        %1554 = vmatprep.mubr.bf16.mxu0 0
        %1555 = vmatmul.mubr.bf16.gmra.mrb[0].mxu0 %v1451
        %v1556 = vpop.f32.mrb[0].mxu0
        %v1557 = vadd.f32 0.0, %v1556
        %v1558 = vpop.f32.mrb[0].mxu0
        %v1559 = vpop.f32.mrb[0].mxu0
        %v1560 = vadd.f32 0.0, %v1559
        %v1561 = vpop.f32.mrb[0].mxu0
        %1562 = vmatprep.mubr.bf16.mxu0 0
        %1563 = vmatmul.mubr.bf16.gmra.mrb[0].mxu0 %v1452
        %v1564 = vpop.f32.mrb[0].mxu0
        %v1565 = vadd.f32 0.0, %v1564
        %v1566 = vpop.f32.mrb[0].mxu0
        %v1567 = vpop.f32.mrb[0].mxu0
        %v1568 = vadd.f32 0.0, %v1567
        %v1569 = vpop.f32.mrb[0].mxu0
        %1570 = vmatprep.mubr.bf16.mxu0 0
        %1571 = vmatmul.mubr.bf16.gmra.mrb[0].mxu0 %v1453
        %v1572 = vpop.f32.mrb[0].mxu0
        %v1573 = vadd.f32 0.0, %v1572
        %v1574 = vpop.f32.mrb[0].mxu0
        %v1575 = vpop.f32.mrb[0].mxu0
        %v1576 = vadd.f32 0.0, %v1575
        %v1577 = vpop.f32.mrb[0].mxu0
        %1578 = vmatprep.mubr.bf16.mxu0 0
        %1579 = vmatmul.mubr.bf16.gmra.mrb[0].mxu0 %v1454
        %v1580 = vpop.f32.mrb[0].mxu0
        %v1581 = vadd.f32 0.0, %v1580
        %v1582 = vpop.f32.mrb[0].mxu0
        %v1583 = vpop.f32.mrb[0].mxu0
        %v1584 = vadd.f32 0.0, %v1583
        %v1585 = vpop.f32.mrb[0].mxu0
        %1586 = vmatprep.mubr.bf16.mxu0 0
        %1587 = vmatmul.mubr.bf16.gmra.mrb[0].mxu0 %v1455
        %v1588 = vpop.f32.mrb[0].mxu0
        %v1589 = vadd.f32 0.0, %v1588
        %v1590 = vpop.f32.mrb[0].mxu0
        %v1591 = vpop.f32.mrb[0].mxu0
        %v1592 = vadd.f32 0.0, %v1591
        %v1593 = vpop.f32.mrb[0].mxu0
        %1594 = vmatprep.mubr.bf16.mxu0 0
        %1595 = vmatmul.mubr.bf16.gmra.mrb[0].mxu0 %v1456
        %v1596 = vpop.f32.mrb[0].mxu0
        %v1597 = vadd.f32 0.0, %v1596
        %v1598 = vpop.f32.mrb[0].mxu0
        %v1599 = vpop.f32.mrb[0].mxu0
        %v1600 = vadd.f32 0.0, %v1599
        %v1601 = vpop.f32.mrb[0].mxu0
        %1602 = vmatprep.mubr.bf16.mxu0 0
        %1603 = vmatmul.mubr.bf16.gmra.mrb[0].mxu0 %v1457
        %v1604 = vpop.f32.mrb[0].mxu0
        %v1605 = vadd.f32 0.0, %v1604
        %v1606 = vpop.f32.mrb[0].mxu0
        %v1607 = vpop.f32.mrb[0].mxu0
        %v1608 = vadd.f32 0.0, %v1607
        %v1609 = vpop.f32.mrb[0].mxu0
        %1610 = vmatprep.mubr.bf16.mxu0 0
        %1611 = vmatmul.mubr.bf16.gmra.mrb[0].mxu0 %v1458
        %v1612 = vpop.f32.mrb[0].mxu0
        %v1613 = vadd.f32 0.0, %v1612
        %v1614 = vpop.f32.mrb[0].mxu0
        %v1615 = vpop.f32.mrb[0].mxu0
        %v1616 = vadd.f32 0.0, %v1615
        %v1617 = vpop.f32.mrb[0].mxu0
        %1618 = vmatprep.mubr.bf16.mxu0 0
        %1619 = vmatmul.mubr.bf16.gmra.mrb[0].mxu0 %v1459
        %v1620 = vpop.f32.mrb[0].mxu0
        %v1621 = vadd.f32 0.0, %v1620
        %v1622 = vpop.f32.mrb[0].mxu0
        %v1623 = vpop.f32.mrb[0].mxu0
        %v1624 = vadd.f32 0.0, %v1623
        %v1625 = vpop.f32.mrb[0].mxu0
        %1626 = vmatprep.mubr.bf16.mxu0 0
        %1627 = vmatmul.mubr.bf16.gmra.mrb[0].mxu0 %v1460
        %v1628 = vpop.f32.mrb[0].mxu0
        %v1629 = vadd.f32 0.0, %v1628
        %v1630 = vpop.f32.mrb[0].mxu0
        %v1631 = vpop.f32.mrb[0].mxu0
        %v1632 = vadd.f32 0.0, %v1631
        %v1633 = vpop.f32.mrb[0].mxu0
        %1634 = vmatprep.mubr.bf16.mxu0 0
        %1635 = vmatmul.mubr.bf16.gmra.mrb[0].mxu0 %v1461
        %v1636 = vpop.f32.mrb[0].mxu0
        %v1637 = vadd.f32 0.0, %v1636
        %v1638 = vpop.f32.mrb[0].mxu0
        %v1639 = vpop.f32.mrb[0].mxu0
        %v1640 = vadd.f32 0.0, %v1639
        %v1641 = vpop.f32.mrb[0].mxu0
        %1642 = vmatprep.mubr.bf16.mxu0 0
        %1643 = vmatmul.mubr.bf16.gmra.mrb[0].mxu0 %v1462
        %v1644 = vpop.f32.mrb[0].mxu0
        %v1645 = vadd.f32 0.0, %v1644
        %v1646 = vpop.f32.mrb[0].mxu0
        %v1647 = vpop.f32.mrb[0].mxu0
        %v1648 = vadd.f32 0.0, %v1647
        %v1649 = vpop.f32.mrb[0].mxu0
        %1650 = vmatprep.mubr.bf16.mxu0 0
        %1651 = vmatmul.mubr.bf16.gmra.mrb[0].mxu0 %v1463
        %v1652 = vpop.f32.mrb[0].mxu0
        %v1653 = vadd.f32 0.0, %v1652
        %v1654 = vpop.f32.mrb[0].mxu0
        %v1655 = vpop.f32.mrb[0].mxu0
        %v1656 = vadd.f32 0.0, %v1655
        %v1657 = vpop.f32.mrb[0].mxu0
        %1658 = vmatprep.mubr.bf16.mxu0 0
        %1659 = vmatmul.mubr.bf16.gmra.mrb[0].mxu0 %v1464
        %v1660 = vpop.f32.mrb[0].mxu0
        %v1661 = vadd.f32 0.0, %v1660
        %v1662 = vpop.f32.mrb[0].mxu0
        %v1663 = vpop.f32.mrb[0].mxu0
        %v1664 = vadd.f32 0.0, %v1663
        %v1665 = vpop.f32.mrb[0].mxu0
        %1666 = vmatprep.mubr.bf16.mxu0 0
        %1667 = vmatmul.mubr.bf16.gmra.mrb[0].mxu0 %v1465
        %v1668 = vpop.f32.mrb[0].mxu0
        %v1669 = vadd.f32 0.0, %v1668
        %v1670 = vpop.f32.mrb[0].mxu0
        %v1671 = vpop.f32.mrb[0].mxu0
        %v1672 = vadd.f32 0.0, %v1671
        %v1673 = vpop.f32.mrb[0].mxu0
        %1674 = vdwg.mxu0
        %1675 = vxpose.xlu0.b32.start [1/16] %v1549, 128
        %1676 = vxpose.xlu0.b32.cont [2/16] %v1552, 128
        %1677 = vxpose.xlu0.b32.cont [3/16] %v1557, 128
        %1678 = vxpose.xlu0.b32.cont [4/16] %v1560, 128
        %1679 = vxpose.xlu0.b32.cont [5/16] %v1565, 128
        %1680 = vxpose.xlu0.b32.cont [6/16] %v1568, 128
        %1681 = vxpose.xlu0.b32.cont [7/16] %v1573, 128
        %1682 = vxpose.xlu0.b32.cont [8/16] %v1576, 128
        %1683 = vxpose.xlu0.b32.cont [9/16] 0.0, 128
        %1684 = vxpose.xlu0.b32.cont [10/16] 0.0, 128
        %1685 = vxpose.xlu0.b32.cont [11/16] 0.0, 128
        %1686 = vxpose.xlu0.b32.cont [12/16] 0.0, 128
        %1687 = vxpose.xlu0.b32.cont [13/16] 0.0, 128
        %1688 = vxpose.xlu0.b32.cont [14/16] 0.0, 128
        %1689 = vxpose.xlu0.b32.cont [15/16] 0.0, 128
        %1690 = vxpose.xlu0.b32.end [16/16] 0.0, 128
        %v1691 = vpop.trf.xlu0
        %v1692 = vpop.trf.xlu0
        %v1693 = vpop.trf.xlu0
        %v1694 = vpop.trf.xlu0
        %v1695 = vpop.trf.xlu0
        %v1696 = vpop.trf.xlu0
        %v1697 = vpop.trf.xlu0
        %v1698 = vpop.trf.xlu0
        %v1699 = vpop.trf.xlu0
        %v1700 = vpop.trf.xlu0
        %v1701 = vpop.trf.xlu0
        %v1702 = vpop.trf.xlu0
        %v1703 = vpop.trf.xlu0
        %v1704 = vpop.trf.xlu0
        %v1705 = vpop.trf.xlu0
        %v1706 = vpop.trf.xlu0
        %1707 = vxpose.xlu0.b32.start [1/16] %v1581, 128
        %1708 = vxpose.xlu0.b32.cont [2/16] %v1584, 128
        %1709 = vxpose.xlu0.b32.cont [3/16] %v1589, 128
        %1710 = vxpose.xlu0.b32.cont [4/16] %v1592, 128
        %1711 = vxpose.xlu0.b32.cont [5/16] %v1597, 128
        %1712 = vxpose.xlu0.b32.cont [6/16] %v1600, 128
        %1713 = vxpose.xlu0.b32.cont [7/16] %v1605, 128
        %1714 = vxpose.xlu0.b32.cont [8/16] %v1608, 128
        %1715 = vxpose.xlu0.b32.cont [9/16] 0.0, 128
        %1716 = vxpose.xlu0.b32.cont [10/16] 0.0, 128
        %1717 = vxpose.xlu0.b32.cont [11/16] 0.0, 128
        %1718 = vxpose.xlu0.b32.cont [12/16] 0.0, 128
        %1719 = vxpose.xlu0.b32.cont [13/16] 0.0, 128
        %1720 = vxpose.xlu0.b32.cont [14/16] 0.0, 128
        %1721 = vxpose.xlu0.b32.cont [15/16] 0.0, 128
        %1722 = vxpose.xlu0.b32.end [16/16] 0.0, 128
        %v1723 = vpop.trf.xlu0
        %v1724 = vpop.trf.xlu0
        %v1725 = vpop.trf.xlu0
        %v1726 = vpop.trf.xlu0
        %v1727 = vpop.trf.xlu0
        %v1728 = vpop.trf.xlu0
        %v1729 = vpop.trf.xlu0
        %v1730 = vpop.trf.xlu0
        %v1731 = vpop.trf.xlu0
        %v1732 = vpop.trf.xlu0
        %v1733 = vpop.trf.xlu0
        %v1734 = vpop.trf.xlu0
        %v1735 = vpop.trf.xlu0
        %v1736 = vpop.trf.xlu0
        %v1737 = vpop.trf.xlu0
        %v1738 = vpop.trf.xlu0
        %1739 = vxpose.xlu0.b32.start [1/16] %v1613, 128
        %1740 = vxpose.xlu0.b32.cont [2/16] %v1616, 128
        %1741 = vxpose.xlu0.b32.cont [3/16] %v1621, 128
        %1742 = vxpose.xlu0.b32.cont [4/16] %v1624, 128
        %1743 = vxpose.xlu0.b32.cont [5/16] %v1629, 128
        %1744 = vxpose.xlu0.b32.cont [6/16] %v1632, 128
        %1745 = vxpose.xlu0.b32.cont [7/16] %v1637, 128
        %1746 = vxpose.xlu0.b32.cont [8/16] %v1640, 128
        %1747 = vxpose.xlu0.b32.cont [9/16] 0.0, 128
        %1748 = vxpose.xlu0.b32.cont [10/16] 0.0, 128
        %1749 = vxpose.xlu0.b32.cont [11/16] 0.0, 128
        %1750 = vxpose.xlu0.b32.cont [12/16] 0.0, 128
        %1751 = vxpose.xlu0.b32.cont [13/16] 0.0, 128
        %1752 = vxpose.xlu0.b32.cont [14/16] 0.0, 128
        %1753 = vxpose.xlu0.b32.cont [15/16] 0.0, 128
        %1754 = vxpose.xlu0.b32.end [16/16] 0.0, 128
        %v1755 = vpop.trf.xlu0
        %v1756 = vpop.trf.xlu0
        %v1757 = vpop.trf.xlu0
        %v1758 = vpop.trf.xlu0
        %v1759 = vpop.trf.xlu0
        %v1760 = vpop.trf.xlu0
        %v1761 = vpop.trf.xlu0
        %v1762 = vpop.trf.xlu0
        %v1763 = vpop.trf.xlu0
        %v1764 = vpop.trf.xlu0
        %v1765 = vpop.trf.xlu0
        %v1766 = vpop.trf.xlu0
        %v1767 = vpop.trf.xlu0
        %v1768 = vpop.trf.xlu0
        %v1769 = vpop.trf.xlu0
        %v1770 = vpop.trf.xlu0
        %1771 = vxpose.xlu0.b32.start [1/16] %v1645, 128
        %1772 = vxpose.xlu0.b32.cont [2/16] %v1648, 128
        %1773 = vxpose.xlu0.b32.cont [3/16] %v1653, 128
        %1774 = vxpose.xlu0.b32.cont [4/16] %v1656, 128
        %1775 = vxpose.xlu0.b32.cont [5/16] %v1661, 128
        %1776 = vxpose.xlu0.b32.cont [6/16] %v1664, 128
        %1777 = vxpose.xlu0.b32.cont [7/16] %v1669, 128
        %1778 = vxpose.xlu0.b32.cont [8/16] %v1672, 128
        %1779 = vxpose.xlu0.b32.cont [9/16] 0.0, 128
        %1780 = vxpose.xlu0.b32.cont [10/16] 0.0, 128
        %1781 = vxpose.xlu0.b32.cont [11/16] 0.0, 128
        %1782 = vxpose.xlu0.b32.cont [12/16] 0.0, 128
        %1783 = vxpose.xlu0.b32.cont [13/16] 0.0, 128
        %1784 = vxpose.xlu0.b32.cont [14/16] 0.0, 128
        %1785 = vxpose.xlu0.b32.cont [15/16] 0.0, 128
        %1786 = vxpose.xlu0.b32.end [16/16] 0.0, 128
        %v1787 = vpop.trf.xlu0
        %v1788 = vpop.trf.xlu0
        %v1789 = vpop.trf.xlu0
        %v1790 = vpop.trf.xlu0
        %v1791 = vpop.trf.xlu0
        %v1792 = vpop.trf.xlu0
        %v1793 = vpop.trf.xlu0
        %v1794 = vpop.trf.xlu0
        %v1795 = vpop.trf.xlu0
        %v1796 = vpop.trf.xlu0
        %v1797 = vpop.trf.xlu0
        %v1798 = vpop.trf.xlu0
        %v1799 = vpop.trf.xlu0
        %v1800 = vpop.trf.xlu0
        %v1801 = vpop.trf.xlu0
        %v1802 = vpop.trf.xlu0
        %1835 = vrot.lane.b32.xlu0 %v1549, 64
        %v1836 = vpop.permute.xlu0 %1835
        %1837 = vrot.lane.b32.xlu0 %v1552, 64
        %v1838 = vpop.permute.xlu0 %1837
        %1839 = vrot.lane.b32.xlu0 %v1557, 64
        %v1840 = vpop.permute.xlu0 %1839
        %1841 = vrot.lane.b32.xlu0 %v1560, 64
        %v1842 = vpop.permute.xlu0 %1841
        %1843 = vrot.lane.b32.xlu0 %v1565, 64
        %v1844 = vpop.permute.xlu0 %1843
        %1845 = vrot.lane.b32.xlu0 %v1568, 64
        %v1846 = vpop.permute.xlu0 %1845
        %1847 = vrot.lane.b32.xlu0 %v1573, 64
        %v1848 = vpop.permute.xlu0 %1847
        %1849 = vrot.lane.b32.xlu0 %v1576, 64
        %v1850 = vpop.permute.xlu0 %1849
        %1851 = vrot.lane.b32.xlu0 %v1581, 64
        %v1852 = vpop.permute.xlu0 %1851
        %1853 = vrot.lane.b32.xlu0 %v1584, 64
        %v1854 = vpop.permute.xlu0 %1853
        %1855 = vrot.lane.b32.xlu0 %v1589, 64
        %v1856 = vpop.permute.xlu0 %1855
        %1857 = vrot.lane.b32.xlu0 %v1592, 64
        %v1858 = vpop.permute.xlu0 %1857
        %1859 = vrot.lane.b32.xlu0 %v1597, 64
        %v1860 = vpop.permute.xlu0 %1859
        %1861 = vrot.lane.b32.xlu0 %v1600, 64
        %v1862 = vpop.permute.xlu0 %1861
        %1863 = vrot.lane.b32.xlu0 %v1605, 64
        %v1864 = vpop.permute.xlu0 %1863
        %1865 = vrot.lane.b32.xlu0 %v1608, 64
        %v1866 = vpop.permute.xlu0 %1865
        %1867 = vrot.lane.b32.xlu0 %v1613, 64
        %v1868 = vpop.permute.xlu0 %1867
        %1869 = vrot.lane.b32.xlu0 %v1616, 64
        %v1870 = vpop.permute.xlu0 %1869
        %1871 = vrot.lane.b32.xlu0 %v1621, 64
        %v1872 = vpop.permute.xlu0 %1871
        %1873 = vrot.lane.b32.xlu0 %v1624, 64
        %v1874 = vpop.permute.xlu0 %1873
        %1875 = vrot.lane.b32.xlu0 %v1629, 64
        %v1876 = vpop.permute.xlu0 %1875
        %1877 = vrot.lane.b32.xlu0 %v1632, 64
        %v1878 = vpop.permute.xlu0 %1877
        %1879 = vrot.lane.b32.xlu0 %v1637, 64
        %v1880 = vpop.permute.xlu0 %1879
        %1881 = vrot.lane.b32.xlu0 %v1640, 64
        %v1882 = vpop.permute.xlu0 %1881
        %1883 = vrot.lane.b32.xlu0 %v1645, 64
        %v1884 = vpop.permute.xlu0 %1883
        %1885 = vrot.lane.b32.xlu0 %v1648, 64
        %v1886 = vpop.permute.xlu0 %1885
        %1887 = vrot.lane.b32.xlu0 %v1653, 64
        %v1888 = vpop.permute.xlu0 %1887
        %1889 = vrot.lane.b32.xlu0 %v1656, 64
        %v1890 = vpop.permute.xlu0 %1889
        %1891 = vrot.lane.b32.xlu0 %v1661, 64
        %v1892 = vpop.permute.xlu0 %1891
        %1893 = vrot.lane.b32.xlu0 %v1664, 64
        %v1894 = vpop.permute.xlu0 %1893
        %1895 = vrot.lane.b32.xlu0 %v1669, 64
        %v1896 = vpop.permute.xlu0 %1895
        %1897 = vrot.lane.b32.xlu0 %v1672, 64
        %v1898 = vpop.permute.xlu0 %1897
        %1931 = vxpose.xlu0.b32.start [1/16] %v1836, 128
        %1932 = vxpose.xlu0.b32.cont [2/16] %v1838, 128
        %1933 = vxpose.xlu0.b32.cont [3/16] %v1840, 128
        %1934 = vxpose.xlu0.b32.cont [4/16] %v1842, 128
        %1935 = vxpose.xlu0.b32.cont [5/16] %v1844, 128
        %1936 = vxpose.xlu0.b32.cont [6/16] %v1846, 128
        %1937 = vxpose.xlu0.b32.cont [7/16] %v1848, 128
        %1938 = vxpose.xlu0.b32.cont [8/16] %v1850, 128
        %1939 = vxpose.xlu0.b32.cont [9/16] 0.0, 128
        %1940 = vxpose.xlu0.b32.cont [10/16] 0.0, 128
        %1941 = vxpose.xlu0.b32.cont [11/16] 0.0, 128
        %1942 = vxpose.xlu0.b32.cont [12/16] 0.0, 128
        %1943 = vxpose.xlu0.b32.cont [13/16] 0.0, 128
        %1944 = vxpose.xlu0.b32.cont [14/16] 0.0, 128
        %1945 = vxpose.xlu0.b32.cont [15/16] 0.0, 128
        %1946 = vxpose.xlu0.b32.end [16/16] 0.0, 128
        %v1947 = vpop.trf.xlu0
        %v1948 = vpop.trf.xlu0
        %v1949 = vpop.trf.xlu0
        %v1950 = vpop.trf.xlu0
        %v1951 = vpop.trf.xlu0
        %v1952 = vpop.trf.xlu0
        %v1953 = vpop.trf.xlu0
        %v1954 = vpop.trf.xlu0
        %v1955 = vpop.trf.xlu0
        %v1956 = vpop.trf.xlu0
        %v1957 = vpop.trf.xlu0
        %v1958 = vpop.trf.xlu0
        %v1959 = vpop.trf.xlu0
        %v1960 = vpop.trf.xlu0
        %v1961 = vpop.trf.xlu0
        %v1962 = vpop.trf.xlu0
        %1963 = vxpose.xlu0.b32.start [1/16] %v1852, 128
        %1964 = vxpose.xlu0.b32.cont [2/16] %v1854, 128
        %1965 = vxpose.xlu0.b32.cont [3/16] %v1856, 128
        %1966 = vxpose.xlu0.b32.cont [4/16] %v1858, 128
        %1967 = vxpose.xlu0.b32.cont [5/16] %v1860, 128
        %1968 = vxpose.xlu0.b32.cont [6/16] %v1862, 128
        %1969 = vxpose.xlu0.b32.cont [7/16] %v1864, 128
        %1970 = vxpose.xlu0.b32.cont [8/16] %v1866, 128
        %1971 = vxpose.xlu0.b32.cont [9/16] 0.0, 128
        %1972 = vxpose.xlu0.b32.cont [10/16] 0.0, 128
        %1973 = vxpose.xlu0.b32.cont [11/16] 0.0, 128
        %1974 = vxpose.xlu0.b32.cont [12/16] 0.0, 128
        %1975 = vxpose.xlu0.b32.cont [13/16] 0.0, 128
        %1976 = vxpose.xlu0.b32.cont [14/16] 0.0, 128
        %1977 = vxpose.xlu0.b32.cont [15/16] 0.0, 128
        %1978 = vxpose.xlu0.b32.end [16/16] 0.0, 128
        %v1979 = vpop.trf.xlu0
        %v1980 = vpop.trf.xlu0
        %v1981 = vpop.trf.xlu0
        %v1982 = vpop.trf.xlu0
        %v1983 = vpop.trf.xlu0
        %v1984 = vpop.trf.xlu0
        %v1985 = vpop.trf.xlu0
        %v1986 = vpop.trf.xlu0
        %v1987 = vpop.trf.xlu0
        %v1988 = vpop.trf.xlu0
        %v1989 = vpop.trf.xlu0
        %v1990 = vpop.trf.xlu0
        %v1991 = vpop.trf.xlu0
        %v1992 = vpop.trf.xlu0
        %v1993 = vpop.trf.xlu0
        %v1994 = vpop.trf.xlu0
        %1995 = vxpose.xlu0.b32.start [1/16] %v1868, 128
        %1996 = vxpose.xlu0.b32.cont [2/16] %v1870, 128
        %1997 = vxpose.xlu0.b32.cont [3/16] %v1872, 128
        %1998 = vxpose.xlu0.b32.cont [4/16] %v1874, 128
        %1999 = vxpose.xlu0.b32.cont [5/16] %v1876, 128
        %2000 = vxpose.xlu0.b32.cont [6/16] %v1878, 128
        %2001 = vxpose.xlu0.b32.cont [7/16] %v1880, 128
        %2002 = vxpose.xlu0.b32.cont [8/16] %v1882, 128
        %2003 = vxpose.xlu0.b32.cont [9/16] 0.0, 128
        %2004 = vxpose.xlu0.b32.cont [10/16] 0.0, 128
        %2005 = vxpose.xlu0.b32.cont [11/16] 0.0, 128
        %2006 = vxpose.xlu0.b32.cont [12/16] 0.0, 128
        %2007 = vxpose.xlu0.b32.cont [13/16] 0.0, 128
        %2008 = vxpose.xlu0.b32.cont [14/16] 0.0, 128
        %2009 = vxpose.xlu0.b32.cont [15/16] 0.0, 128
        %2010 = vxpose.xlu0.b32.end [16/16] 0.0, 128
        %v2011 = vpop.trf.xlu0
        %v2012 = vpop.trf.xlu0
        %v2013 = vpop.trf.xlu0
        %v2014 = vpop.trf.xlu0
        %v2015 = vpop.trf.xlu0
        %v2016 = vpop.trf.xlu0
        %v2017 = vpop.trf.xlu0
        %v2018 = vpop.trf.xlu0
        %v2019 = vpop.trf.xlu0
        %v2020 = vpop.trf.xlu0
        %v2021 = vpop.trf.xlu0
        %v2022 = vpop.trf.xlu0
        %v2023 = vpop.trf.xlu0
        %v2024 = vpop.trf.xlu0
        %v2025 = vpop.trf.xlu0
        %v2026 = vpop.trf.xlu0
        %2027 = vxpose.xlu0.b32.start [1/16] %v1884, 128
        %2028 = vxpose.xlu0.b32.cont [2/16] %v1886, 128
        %2029 = vxpose.xlu0.b32.cont [3/16] %v1888, 128
        %2030 = vxpose.xlu0.b32.cont [4/16] %v1890, 128
        %2031 = vxpose.xlu0.b32.cont [5/16] %v1892, 128
        %2032 = vxpose.xlu0.b32.cont [6/16] %v1894, 128
        %2033 = vxpose.xlu0.b32.cont [7/16] %v1896, 128
        %2034 = vxpose.xlu0.b32.cont [8/16] %v1898, 128
        %2035 = vxpose.xlu0.b32.cont [9/16] 0.0, 128
        %2036 = vxpose.xlu0.b32.cont [10/16] 0.0, 128
        %2037 = vxpose.xlu0.b32.cont [11/16] 0.0, 128
        %2038 = vxpose.xlu0.b32.cont [12/16] 0.0, 128
        %2039 = vxpose.xlu0.b32.cont [13/16] 0.0, 128
        %2040 = vxpose.xlu0.b32.cont [14/16] 0.0, 128
        %2041 = vxpose.xlu0.b32.cont [15/16] 0.0, 128
        %2042 = vxpose.xlu0.b32.end [16/16] 0.0, 128
        %v2043 = vpop.trf.xlu0
        %v2044 = vpop.trf.xlu0
        %v2045 = vpop.trf.xlu0
        %v2046 = vpop.trf.xlu0
        %v2047 = vpop.trf.xlu0
        %v2048 = vpop.trf.xlu0
        %v2049 = vpop.trf.xlu0
        %v2050 = vpop.trf.xlu0
        %v2051 = vpop.trf.xlu0
        %v2052 = vpop.trf.xlu0
        %v2053 = vpop.trf.xlu0
        %v2054 = vpop.trf.xlu0
        %v2055 = vpop.trf.xlu0
        %v2056 = vpop.trf.xlu0
        %v2057 = vpop.trf.xlu0
        %v2058 = vpop.trf.xlu0
        %2091 = vrot.lane.b32.xlu0 %v1947, 64
        %v2092 = vpop.permute.xlu0 %2091
        %2093 = vrot.lane.b32.xlu0 %v1948, 64
        %v2094 = vpop.permute.xlu0 %2093
        %2095 = vrot.lane.b32.xlu0 %v1949, 64
        %v2096 = vpop.permute.xlu0 %2095
        %2097 = vrot.lane.b32.xlu0 %v1950, 64
        %v2098 = vpop.permute.xlu0 %2097
        %2099 = vrot.lane.b32.xlu0 %v1951, 64
        %v2100 = vpop.permute.xlu0 %2099
        %2101 = vrot.lane.b32.xlu0 %v1952, 64
        %v2102 = vpop.permute.xlu0 %2101
        %2103 = vrot.lane.b32.xlu0 %v1953, 64
        %v2104 = vpop.permute.xlu0 %2103
        %2105 = vrot.lane.b32.xlu0 %v1954, 64
        %v2106 = vpop.permute.xlu0 %2105
        %2107 = vrot.lane.b32.xlu0 %v1979, 64
        %v2108 = vpop.permute.xlu0 %2107
        %2109 = vrot.lane.b32.xlu0 %v1980, 64
        %v2110 = vpop.permute.xlu0 %2109
        %2111 = vrot.lane.b32.xlu0 %v1981, 64
        %v2112 = vpop.permute.xlu0 %2111
        %2113 = vrot.lane.b32.xlu0 %v1982, 64
        %v2114 = vpop.permute.xlu0 %2113
        %2115 = vrot.lane.b32.xlu0 %v1983, 64
        %v2116 = vpop.permute.xlu0 %2115
        %2117 = vrot.lane.b32.xlu0 %v1984, 64
        %v2118 = vpop.permute.xlu0 %2117
        %2119 = vrot.lane.b32.xlu0 %v1985, 64
        %v2120 = vpop.permute.xlu0 %2119
        %2121 = vrot.lane.b32.xlu0 %v1986, 64
        %v2122 = vpop.permute.xlu0 %2121
        %2123 = vrot.lane.b32.xlu0 %v2011, 64
        %v2124 = vpop.permute.xlu0 %2123
        %2125 = vrot.lane.b32.xlu0 %v2012, 64
        %v2126 = vpop.permute.xlu0 %2125
        %2127 = vrot.lane.b32.xlu0 %v2013, 64
        %v2128 = vpop.permute.xlu0 %2127
        %2129 = vrot.lane.b32.xlu0 %v2014, 64
        %v2130 = vpop.permute.xlu0 %2129
        %2131 = vrot.lane.b32.xlu0 %v2015, 64
        %v2132 = vpop.permute.xlu0 %2131
        %2133 = vrot.lane.b32.xlu0 %v2016, 64
        %v2134 = vpop.permute.xlu0 %2133
        %2135 = vrot.lane.b32.xlu0 %v2017, 64
        %v2136 = vpop.permute.xlu0 %2135
        %2137 = vrot.lane.b32.xlu0 %v2018, 64
        %v2138 = vpop.permute.xlu0 %2137
        %2139 = vrot.lane.b32.xlu0 %v2043, 64
        %v2140 = vpop.permute.xlu0 %2139
        %2141 = vrot.lane.b32.xlu0 %v2044, 64
        %v2142 = vpop.permute.xlu0 %2141
        %2143 = vrot.lane.b32.xlu0 %v2045, 64
        %v2144 = vpop.permute.xlu0 %2143
        %2145 = vrot.lane.b32.xlu0 %v2046, 64
        %v2146 = vpop.permute.xlu0 %2145
        %2147 = vrot.lane.b32.xlu0 %v2047, 64
        %v2148 = vpop.permute.xlu0 %2147
        %2149 = vrot.lane.b32.xlu0 %v2048, 64
        %v2150 = vpop.permute.xlu0 %2149
        %2151 = vrot.lane.b32.xlu0 %v2049, 64
        %v2152 = vpop.permute.xlu0 %2151
        %2153 = vrot.lane.b32.xlu0 %v2050, 64
        %v2154 = vpop.permute.xlu0 %2153
        %v2187 = vsel %vm439, %v1691, %v2092
        %v2188 = vsel %vm439, %v1692, %v2094
        %v2189 = vsel %vm439, %v1693, %v2096
        %v2190 = vsel %vm439, %v1694, %v2098
        %v2191 = vsel %vm439, %v1695, %v2100
        %v2192 = vsel %vm439, %v1696, %v2102
        %v2193 = vsel %vm439, %v1697, %v2104
        %v2194 = vsel %vm439, %v1698, %v2106
        %v2195 = vsel %vm439, %v1723, %v2108
        %v2196 = vsel %vm439, %v1724, %v2110
        %v2197 = vsel %vm439, %v1725, %v2112
        %v2198 = vsel %vm439, %v1726, %v2114
        %v2199 = vsel %vm439, %v1727, %v2116
        %v2200 = vsel %vm439, %v1728, %v2118
        %v2201 = vsel %vm439, %v1729, %v2120
        %v2202 = vsel %vm439, %v1730, %v2122
        %v2203 = vsel %vm439, %v1755, %v2124
        %v2204 = vsel %vm439, %v1756, %v2126
        %v2205 = vsel %vm439, %v1757, %v2128
        %v2206 = vsel %vm439, %v1758, %v2130
        %v2207 = vsel %vm439, %v1759, %v2132
        %v2208 = vsel %vm439, %v1760, %v2134
        %v2209 = vsel %vm439, %v1761, %v2136
        %v2210 = vsel %vm439, %v1762, %v2138
        %v2211 = vsel %vm439, %v1787, %v2140
        %v2212 = vsel %vm439, %v1788, %v2142
        %v2213 = vsel %vm439, %v1789, %v2144
        %v2214 = vsel %vm439, %v1790, %v2146
        %v2215 = vsel %vm439, %v1791, %v2148
        %v2216 = vsel %vm439, %v1792, %v2150
        %v2217 = vsel %vm439, %v1793, %v2152
        %v2218 = vsel %vm439, %v1794, %v2154
        %v2219 = vpack.c.bf16 %v2188, %v2187
        %v2220 = vpack.c.bf16 %v2190, %v2189
        %v2221 = vpack.c.bf16 %v2192, %v2191
        %v2222 = vpack.c.bf16 %v2194, %v2193
        %v2223 = vpack.c.bf16 %v2196, %v2195
        %v2224 = vpack.c.bf16 %v2198, %v2197
        %v2225 = vpack.c.bf16 %v2200, %v2199
        %v2226 = vpack.c.bf16 %v2202, %v2201
        %v2227 = vpack.c.bf16 %v2204, %v2203
        %v2228 = vpack.c.bf16 %v2206, %v2205
        %v2229 = vpack.c.bf16 %v2208, %v2207
        %v2230 = vpack.c.bf16 %v2210, %v2209
        %v2231 = vpack.c.bf16 %v2212, %v2211
        %v2232 = vpack.c.bf16 %v2214, %v2213
        %v2233 = vpack.c.bf16 %v2216, %v2215
        %v2234 = vpack.c.bf16 %v2218, %v2217
        %v2251 = vunpack.c.l.b16 %v343
        %v2252 = vunpack.c.l.b16 %v344
        %v2253 = vunpack.c.l.b16 %v345
        %v2254 = vunpack.c.l.b16 %v346
        %v2255 = vunpack.c.l.b16 %v347
        %v2256 = vunpack.c.l.b16 %v348
        %v2257 = vunpack.c.l.b16 %v349
        %v2258 = vunpack.c.l.b16 %v350
        %v2259 = vunpack.c.l.b16 %v351
        %v2260 = vunpack.c.l.b16 %v352
        %v2261 = vunpack.c.l.b16 %v353
        %v2262 = vunpack.c.l.b16 %v354
        %v2263 = vunpack.c.l.b16 %v355
        %v2264 = vunpack.c.l.b16 %v356
        %v2265 = vunpack.c.l.b16 %v357
        %v2266 = vunpack.c.l.b16 %v358
        %v2267 = vpack.c.b16 %v2252, %v2251
        %v2268 = vpack.c.b16 %v2254, %v2253
        %v2269 = vpack.c.b16 %v2256, %v2255
        %v2270 = vpack.c.b16 %v2258, %v2257
        %v2271 = vpack.c.b16 %v2260, %v2259
        %v2272 = vpack.c.b16 %v2262, %v2261
        %v2273 = vpack.c.b16 %v2264, %v2263
        %v2274 = vpack.c.b16 %v2266, %v2265
        %2283 = vmatprep.subr.bf16.mxu0 0
        %2284 = vmatpush1.bf16.msra.mxu0 %v2267
        %2285 = vmatprep.subr.bf16.mxu0 0
        %2286 = vmatpush1.bf16.msra.mxu0 %v2268
        %2287 = vmatprep.subr.bf16.mxu0 0
        %2288 = vmatpush1.bf16.msra.mxu0 %v2269
        %2289 = vmatprep.subr.bf16.mxu0 0
        %2290 = vmatpush1.bf16.msra.mxu0 %v2270
        %2291 = vmatprep.subr.bf16.mxu0 0
        %2292 = vmatpush1.bf16.msra.mxu0 %v2271
        %2293 = vmatprep.subr.bf16.mxu0 0
        %2294 = vmatpush1.bf16.msra.mxu0 %v2272
        %2295 = vmatprep.subr.bf16.mxu0 0
        %2296 = vmatpush1.bf16.msra.mxu0 %v2273
        %2297 = vmatprep.subr.bf16.mxu0 0
        %2298 = vmatpush1.bf16.msra.mxu0 %v2274
        %2299 = vmatprep.subr.bf16.mxu0 0
        %2300 = vmatpush1.bf16.msra.mxu0 0
        %2301 = vmatprep.subr.bf16.mxu0 0
        %2302 = vmatpush1.bf16.msra.mxu0 0
        %2303 = vmatprep.subr.bf16.mxu0 0
        %2304 = vmatpush1.bf16.msra.mxu0 0
        %2305 = vmatprep.subr.bf16.mxu0 0
        %2306 = vmatpush1.bf16.msra.mxu0 0
        %2307 = vmatprep.subr.bf16.mxu0 0
        %2308 = vmatpush1.bf16.msra.mxu0 0
        %2309 = vmatprep.subr.bf16.mxu0 0
        %2310 = vmatpush1.bf16.msra.mxu0 0
        %2311 = vmatprep.subr.bf16.mxu0 0
        %2312 = vmatpush1.bf16.msra.mxu0 0
        %2313 = vmatprep.subr.bf16.mxu0 0
        %2314 = vmatpush1.bf16.msra.mxu0 0
        %2315 = vmatprep.mubr.bf16.mxu0 0
        %2316 = vmatmul.mubr.bf16.gmra.mrb[0].mxu0 %v2219
        %v2317 = vpop.f32.mrb[0].mxu0
        %v2318 = vadd.f32 0.0, %v2317
        %v2319 = vpop.f32.mrb[0].mxu0
        %v2320 = vpop.f32.mrb[0].mxu0
        %v2321 = vadd.f32 0.0, %v2320
        %v2322 = vpop.f32.mrb[0].mxu0
        %2323 = vmatprep.mubr.bf16.mxu0 0
        %2324 = vmatmul.mubr.bf16.gmra.mrb[0].mxu0 %v2220
        %v2325 = vpop.f32.mrb[0].mxu0
        %v2326 = vadd.f32 0.0, %v2325
        %v2327 = vpop.f32.mrb[0].mxu0
        %v2328 = vpop.f32.mrb[0].mxu0
        %v2329 = vadd.f32 0.0, %v2328
        %v2330 = vpop.f32.mrb[0].mxu0
        %2331 = vmatprep.mubr.bf16.mxu0 0
        %2332 = vmatmul.mubr.bf16.gmra.mrb[0].mxu0 %v2221
        %v2333 = vpop.f32.mrb[0].mxu0
        %v2334 = vadd.f32 0.0, %v2333
        %v2335 = vpop.f32.mrb[0].mxu0
        %v2336 = vpop.f32.mrb[0].mxu0
        %v2337 = vadd.f32 0.0, %v2336
        %v2338 = vpop.f32.mrb[0].mxu0
        %2339 = vmatprep.mubr.bf16.mxu0 0
        %2340 = vmatmul.mubr.bf16.gmra.mrb[0].mxu0 %v2222
        %v2341 = vpop.f32.mrb[0].mxu0
        %v2342 = vadd.f32 0.0, %v2341
        %v2343 = vpop.f32.mrb[0].mxu0
        %v2344 = vpop.f32.mrb[0].mxu0
        %v2345 = vadd.f32 0.0, %v2344
        %v2346 = vpop.f32.mrb[0].mxu0
        %2347 = vmatprep.mubr.bf16.mxu0 0
        %2348 = vmatmul.mubr.bf16.gmra.mrb[0].mxu0 %v2223
        %v2349 = vpop.f32.mrb[0].mxu0
        %v2350 = vadd.f32 0.0, %v2349
        %v2351 = vpop.f32.mrb[0].mxu0
        %v2352 = vpop.f32.mrb[0].mxu0
        %v2353 = vadd.f32 0.0, %v2352
        %v2354 = vpop.f32.mrb[0].mxu0
        %2355 = vmatprep.mubr.bf16.mxu0 0
        %2356 = vmatmul.mubr.bf16.gmra.mrb[0].mxu0 %v2224
        %v2357 = vpop.f32.mrb[0].mxu0
        %v2358 = vadd.f32 0.0, %v2357
        %v2359 = vpop.f32.mrb[0].mxu0
        %v2360 = vpop.f32.mrb[0].mxu0
        %v2361 = vadd.f32 0.0, %v2360
        %v2362 = vpop.f32.mrb[0].mxu0
        %2363 = vmatprep.mubr.bf16.mxu0 0
        %2364 = vmatmul.mubr.bf16.gmra.mrb[0].mxu0 %v2225
        %v2365 = vpop.f32.mrb[0].mxu0
        %v2366 = vadd.f32 0.0, %v2365
        %v2367 = vpop.f32.mrb[0].mxu0
        %v2368 = vpop.f32.mrb[0].mxu0
        %v2369 = vadd.f32 0.0, %v2368
        %v2370 = vpop.f32.mrb[0].mxu0
        %2371 = vmatprep.mubr.bf16.mxu0 0
        %2372 = vmatmul.mubr.bf16.gmra.mrb[0].mxu0 %v2226
        %v2373 = vpop.f32.mrb[0].mxu0
        %v2374 = vadd.f32 0.0, %v2373
        %v2375 = vpop.f32.mrb[0].mxu0
        %v2376 = vpop.f32.mrb[0].mxu0
        %v2377 = vadd.f32 0.0, %v2376
        %v2378 = vpop.f32.mrb[0].mxu0
        %2379 = vmatprep.mubr.bf16.mxu0 0
        %2380 = vmatmul.mubr.bf16.gmra.mrb[0].mxu0 %v2227
        %v2381 = vpop.f32.mrb[0].mxu0
        %v2382 = vadd.f32 0.0, %v2381
        %v2383 = vpop.f32.mrb[0].mxu0
        %v2384 = vpop.f32.mrb[0].mxu0
        %v2385 = vadd.f32 0.0, %v2384
        %v2386 = vpop.f32.mrb[0].mxu0
        %2387 = vmatprep.mubr.bf16.mxu0 0
        %2388 = vmatmul.mubr.bf16.gmra.mrb[0].mxu0 %v2228
        %v2389 = vpop.f32.mrb[0].mxu0
        %v2390 = vadd.f32 0.0, %v2389
        %v2391 = vpop.f32.mrb[0].mxu0
        %v2392 = vpop.f32.mrb[0].mxu0
        %v2393 = vadd.f32 0.0, %v2392
        %v2394 = vpop.f32.mrb[0].mxu0
        %2395 = vmatprep.mubr.bf16.mxu0 0
        %2396 = vmatmul.mubr.bf16.gmra.mrb[0].mxu0 %v2229
        %v2397 = vpop.f32.mrb[0].mxu0
        %v2398 = vadd.f32 0.0, %v2397
        %v2399 = vpop.f32.mrb[0].mxu0
        %v2400 = vpop.f32.mrb[0].mxu0
        %v2401 = vadd.f32 0.0, %v2400
        %v2402 = vpop.f32.mrb[0].mxu0
        %2403 = vmatprep.mubr.bf16.mxu0 0
        %2404 = vmatmul.mubr.bf16.gmra.mrb[0].mxu0 %v2230
        %v2405 = vpop.f32.mrb[0].mxu0
        %v2406 = vadd.f32 0.0, %v2405
        %v2407 = vpop.f32.mrb[0].mxu0
        %v2408 = vpop.f32.mrb[0].mxu0
        %v2409 = vadd.f32 0.0, %v2408
        %v2410 = vpop.f32.mrb[0].mxu0
        %2411 = vmatprep.mubr.bf16.mxu0 0
        %2412 = vmatmul.mubr.bf16.gmra.mrb[0].mxu0 %v2231
        %v2413 = vpop.f32.mrb[0].mxu0
        %v2414 = vadd.f32 0.0, %v2413
        %v2415 = vpop.f32.mrb[0].mxu0
        %v2416 = vpop.f32.mrb[0].mxu0
        %v2417 = vadd.f32 0.0, %v2416
        %v2418 = vpop.f32.mrb[0].mxu0
        %2419 = vmatprep.mubr.bf16.mxu0 0
        %2420 = vmatmul.mubr.bf16.gmra.mrb[0].mxu0 %v2232
        %v2421 = vpop.f32.mrb[0].mxu0
        %v2422 = vadd.f32 0.0, %v2421
        %v2423 = vpop.f32.mrb[0].mxu0
        %v2424 = vpop.f32.mrb[0].mxu0
        %v2425 = vadd.f32 0.0, %v2424
        %v2426 = vpop.f32.mrb[0].mxu0
        %2427 = vmatprep.mubr.bf16.mxu0 0
        %2428 = vmatmul.mubr.bf16.gmra.mrb[0].mxu0 %v2233
        %v2429 = vpop.f32.mrb[0].mxu0
        %v2430 = vadd.f32 0.0, %v2429
        %v2431 = vpop.f32.mrb[0].mxu0
        %v2432 = vpop.f32.mrb[0].mxu0
        %v2433 = vadd.f32 0.0, %v2432
        %v2434 = vpop.f32.mrb[0].mxu0
        %2435 = vmatprep.mubr.bf16.mxu0 0
        %2436 = vmatmul.mubr.bf16.gmra.mrb[0].mxu0 %v2234
        %v2437 = vpop.f32.mrb[0].mxu0
        %v2438 = vadd.f32 0.0, %v2437
        %v2439 = vpop.f32.mrb[0].mxu0
        %v2440 = vpop.f32.mrb[0].mxu0
        %v2441 = vadd.f32 0.0, %v2440
        %v2442 = vpop.f32.mrb[0].mxu0
        %2443 = vdwg.mxu0
        %v2444 = vand.u32 2147483647, %v2318
        %v2445 = vand.u32 2147483647, %v2321
        %v2446 = vand.u32 2147483647, %v2326
        %v2447 = vand.u32 2147483647, %v2329
        %v2448 = vand.u32 2147483647, %v2334
        %v2449 = vand.u32 2147483647, %v2337
        %v2450 = vand.u32 2147483647, %v2342
        %v2451 = vand.u32 2147483647, %v2345
        %v2452 = vand.u32 2147483647, %v2350
        %v2453 = vand.u32 2147483647, %v2353
        %v2454 = vand.u32 2147483647, %v2358
        %v2455 = vand.u32 2147483647, %v2361
        %v2456 = vand.u32 2147483647, %v2366
        %v2457 = vand.u32 2147483647, %v2369
        %v2458 = vand.u32 2147483647, %v2374
        %v2459 = vand.u32 2147483647, %v2377
        %v2460 = vand.u32 2147483647, %v2382
        %v2461 = vand.u32 2147483647, %v2385
        %v2462 = vand.u32 2147483647, %v2390
        %v2463 = vand.u32 2147483647, %v2393
        %v2464 = vand.u32 2147483647, %v2398
        %v2465 = vand.u32 2147483647, %v2401
        %v2466 = vand.u32 2147483647, %v2406
        %v2467 = vand.u32 2147483647, %v2409
        %v2468 = vand.u32 2147483647, %v2414
        %v2469 = vand.u32 2147483647, %v2417
        %v2470 = vand.u32 2147483647, %v2422
        %v2471 = vand.u32 2147483647, %v2425
        %v2472 = vand.u32 2147483647, %v2430
        %v2473 = vand.u32 2147483647, %v2433
        %v2474 = vand.u32 2147483647, %v2438
        %v2475 = vand.u32 2147483647, %v2441
        %2476 = vst.msk [vmem:[%s299] sm:$0xff] %vm439, %v2444
        %2477 = vst.msk [vmem:[%s299 + $0x8] sm:$0xff] %vm439, %v2445
        %2478 = vst.msk [vmem:[%s299 + $0x10] sm:$0xff] %vm439, %v2446
        %2479 = vst.msk [vmem:[%s299 + $0x18] sm:$0xff] %vm439, %v2447
        %2480 = vst.msk [vmem:[%s299 + $0x20] sm:$0xff] %vm439, %v2448
        %2481 = vst.msk [vmem:[%s299 + $0x28] sm:$0xff] %vm439, %v2449
        %2482 = vst.msk [vmem:[%s299 + $0x30] sm:$0xff] %vm439, %v2450
        %2483 = vst.msk [vmem:[%s299 + $0x38] sm:$0xff] %vm439, %v2451
        %2484 = vst.msk [vmem:[%s299 + $0x40] sm:$0xff] %vm439, %v2452
        %2485 = vst.msk [vmem:[%s299 + $0x48] sm:$0xff] %vm439, %v2453
        %2486 = vst.msk [vmem:[%s299 + $0x50] sm:$0xff] %vm439, %v2454
        %2487 = vst.msk [vmem:[%s299 + $0x58] sm:$0xff] %vm439, %v2455
        %2488 = vst.msk [vmem:[%s299 + $0x60] sm:$0xff] %vm439, %v2456
        %2489 = vst.msk [vmem:[%s299 + $0x68] sm:$0xff] %vm439, %v2457
        %2490 = vst.msk [vmem:[%s299 + $0x70] sm:$0xff] %vm439, %v2458
        %2491 = vst.msk [vmem:[%s299 + $0x78] sm:$0xff] %vm439, %v2459
        %2492 = vst.msk [vmem:[%s299 + $0x80] sm:$0xff] %vm439, %v2460
        %2493 = vst.msk [vmem:[%s299 + $0x88] sm:$0xff] %vm439, %v2461
        %2494 = vst.msk [vmem:[%s299 + $0x90] sm:$0xff] %vm439, %v2462
        %2495 = vst.msk [vmem:[%s299 + $0x98] sm:$0xff] %vm439, %v2463
        %2496 = vst.msk [vmem:[%s299 + $0xa0] sm:$0xff] %vm439, %v2464
        %2497 = vst.msk [vmem:[%s299 + $0xa8] sm:$0xff] %vm439, %v2465
        %2498 = vst.msk [vmem:[%s299 + $0xb0] sm:$0xff] %vm439, %v2466
        %2499 = vst.msk [vmem:[%s299 + $0xb8] sm:$0xff] %vm439, %v2467
        %2500 = vst.msk [vmem:[%s299 + $0xc0] sm:$0xff] %vm439, %v2468
        %2501 = vst.msk [vmem:[%s299 + $0xc8] sm:$0xff] %vm439, %v2469
        %2502 = vst.msk [vmem:[%s299 + $0xd0] sm:$0xff] %vm439, %v2470
        %2503 = vst.msk [vmem:[%s299 + $0xd8] sm:$0xff] %vm439, %v2471
        %2504 = vst.msk [vmem:[%s299 + $0xe0] sm:$0xff] %vm439, %v2472
        %2505 = vst.msk [vmem:[%s299 + $0xe8] sm:$0xff] %vm439, %v2473
        %2506 = vst.msk [vmem:[%s299 + $0xf0] sm:$0xff] %vm439, %v2474
        %2507 = vst.msk [vmem:[%s299 + $0xf8] sm:$0xff] %vm439, %v2475
        %s2508 = sand.u32 %s163, 1
        %s2509 = scalar_lea.sflag [#allocation4], %s2508
        %s2510 = sand.u32 %s163, 1
        %s2511 = smul.addr %s2510, 256
        %s2512 = scalar_lea.vmem [#allocation8], %s2511
        // Predicated region
        $region57: #{tpu_custom_call.1} parent=43 // pred_check
          %p2513 = pneg %p173
        $region58: #{tpu_custom_call.1} parent=43 // pred_check_branch
          %2515 = sbr.rel (%p2513) target = $region60
        $region59: #{tpu_custom_call.1} parent=43 // pred_region
          %s2516 = smul.u32 4, %s24
          %s2518 = ssub.s32 4096, 4096
          %2519 = vsyncadd %s2509, %s2518
          %s2520 = smul.addr %s2516, 8
          %s2521 = smul.addr %s2520, 128
          %s2522 = scalar_lea.hbm %s6, %s2521
          %s2523 = sshll.u32 %s2512, 4
          %s2524 = int_to_ptr.vmem [resolvable:$true] %s2523
          %2529 = dma.vmem_to_hbm [thread:$0]  %s2524, 4096, %s2522, %s2509, 128, 128, 8
        $region60: #{tpu_custom_call.1} parent=43 // pred_fallthru
          _
      $region44: #{tpu_custom_call.1} parent=5 // pred_fallthru
        _
      %p2530 = scmp.le.s32.totalorder 2, %s19
      // Predicated region
      $region61: #{tpu_custom_call.1} parent=5 // pred_check
        %p2531 = pneg %p2530
      $region62: #{tpu_custom_call.1} parent=5 // pred_check_branch
        %2533 = sbr.rel (%p2531) target = $region64
      $region63: #{tpu_custom_call.1} parent=5 // pred_region
        %s2534 = ssub.s32 %s19, 2
        // Predicated region
        $region65: #{tpu_custom_call.1} parent=63 // pred_check
          %p2535 = pneg %p179
        $region66: #{tpu_custom_call.1} parent=63 // pred_check_branch
          %2537 = sbr.rel (%p2535) target = $region68
        $region67: #{tpu_custom_call.1} parent=63 // pred_region
          %s2538 = sand.u32 %s164, 1
          %s2539 = scalar_lea.sflag [#allocation4], %s2538
          %s2540 = sand.u32 %s164, 1
          %s2541 = smul.addr %s2540, 256
          %s2542 = scalar_lea.vmem [#allocation8], %s2541
          %2543 = dma.done %s2539, 4096
        $region68: #{tpu_custom_call.1} parent=63 // pred_fallthru
          _
      $region64: #{tpu_custom_call.1} parent=5 // pred_fallthru
        _
    $region6: #{tpu_custom_call.1} parent=1 // loop_footer
      %s23 = sadd.s32 1, %s19
    $region7: #{tpu_custom_call.1} parent=1 // loop_footer_branch
      %18 = sbr.rel target = $region3
    $region8: #{tpu_custom_call.1} parent=1 // loop_exit
      _
    %2544 = vsyncpa [#allocation3], 1
    %s2545 = scalar_lea.sflag [#allocation3], 1
    %2546 = vsyncpa %s2545, 1
    %2547 = vsyncpa [#allocation6], 1
    %2548 = vsyncpa [#allocation4], 1
    %s2549 = scalar_lea.sflag [#allocation4], 1
    %2550 = vsyncpa %s2549, 1

</llo_original>
